<compile_context>
chip_gen: v7x
topology: tpu7x:2x2x1
jax: 0.10.0
libtpu: 0.0.40
codegen_flags: <defaults>
</compile_context>

<pallas_src>
import jax
import jax.numpy as jnp
from jax.experimental import pallas as pl
from jax.experimental.pallas import tpu as pltpu

_SUB = 512  # lanes processed per MXU push inside a tile (one-hot stays in vregs)


def _embedding_gather_kernel(ids_ref, table_t_ref, out_ref):
    # ids_ref:     (1, tile_e)        int32  VMEM -- lane-dense pair ids
    # table_t_ref: (pair_dim, vocab)  f32    VMEM -- pre-transposed table (resident)
    # out_ref:     (tile_e, pair_dim) f32    VMEM -- row-major output block
    pair_dim, vocab = table_t_ref.shape
    tile_e = ids_ref.shape[1]
    table_t = table_t_ref[...]                        # hoist the (tiny) table load

    # Trace-time unrolled: n_chunks is a Python int; each chunk's one-hot is
    # dead before the next chunk, so nothing large stays live across chunks.
    for c in range(tile_e // _SUB):
        lo = c * _SUB
        ids = ids_ref[:, lo:lo + _SUB]                                  # (1, 512)
        row = jax.lax.broadcasted_iota(jnp.int32, (vocab, _SUB), 0)     # (vocab, 512)
        onehot = (row == ids).astype(table_t.dtype)                     # one-hot columns
        # MXU: M=pair_dim, K=vocab, N=512. HIGHEST keeps the f32 table exact
        # through the bf16-pass decomposition (one-hot operand is exact).
        out_t = jnp.dot(table_t, onehot,
                        precision=jax.lax.Precision.HIGHEST,
                        preferred_element_type=jnp.float32)             # (pair_dim, 512)
        # XLU transpose (free slot) -> row-major (512, pair_dim) block.
        out_ref[lo:lo + _SUB, :] = out_t.T.astype(out_ref.dtype)


def _round_up(x, m):
    return ((x + m - 1) // m) * m


def embedding_gather(ids, table_t, *, tile_e=None):
    """out[e, :] = table[ids[e], :], with table_t = table.T of shape (pair_dim, vocab)."""
    pair_dim, vocab = table_t.shape
    e = int(ids.shape[0])
    if e == 0:
        return jnp.zeros((0, pair_dim), table_t.dtype)

    if tile_e is None:
        # Amortize the per-grid-step overhead with big tiles, but keep >=8 tiles
        # when E is large so a v7x megacore can split the "parallel" axis.
        tile_e = max(_SUB, min(8192, _round_up(pl.cdiv(e, 8), _SUB)))
    assert tile_e % _SUB == 0, tile_e

    e_pad = _round_up(e, tile_e)
    # Only the 4-byte ids are padded (pad value 0 is a valid row); outputs for
    # padded ids land in the masked region of the ragged last output block.
    ids_p = jnp.pad(ids.astype(jnp.int32), (0, e_pad - e))[None, :]     # (1, e_pad)
    grid = (e_pad // tile_e,)

    return pl.pallas_call(
        _embedding_gather_kernel,
        out_shape=jax.ShapeDtypeStruct((e, pair_dim), table_t.dtype),
        grid=grid,
        in_specs=[
            pl.BlockSpec((1, tile_e), lambda i: (0, i)),            # lane-dense ids
            pl.BlockSpec((pair_dim, vocab), lambda i: (0, 0)),      # resident table
        ],
        # (tile_e, pair_dim) blocks: pair_dim equals the full last dim so the
        # spec is legal; Pallas masks the ragged last block's writeback.
        out_specs=pl.BlockSpec((tile_e, pair_dim), lambda i: (i, 0)),
        compiler_params=pltpu.CompilerParams(
            dimension_semantics=("parallel",)),                     # v7x: 2 TCs split tiles
        cost_estimate=pl.CostEstimate(
            flops=2 * pair_dim * vocab * e_pad,
            transcendentals=0,
            bytes_accessed=4 * e_pad + 4 * pair_dim * vocab + 4 * e * pair_dim),
    )(ids_p, table_t)


class ProteinEdgeFeature:
    """JAX/Pallas port of vabs.models.layers.ProteinEdgeFeature."""

    def __init__(self, pair_dim, num_atom_type, num_residue_type, *, key):
        self.pair_dim = pair_dim
        self.num_atom_type = num_atom_type
        self.num_residue_type = num_residue_type
        if num_atom_type is not None:
            if num_residue_type is not None:
                vocab = num_residue_type * num_atom_type      # residue_atom_pair_encoder
            else:
                vocab = num_atom_type * num_atom_type         # residue_aa_pair_encoder
        else:
            vocab = num_residue_type * num_residue_type       # residue_pair_encoder
        # nn.Embedding weight, normal(mean=0, std=0.02); no padding_idx in this module.
        self.table = (0.02 * jax.random.normal(key, (vocab, pair_dim))).astype(jnp.float32)
        # Pre-transposed copy for the lane-dense kernel layout (done once at init).
        self.table_t = self.table.T

    def __call__(self, residue, edge_index, atom=None):
        # Index arithmetic mirrors the PyTorch forward exactly; XLA fuses these
        # gathers + mul-add, the Pallas kernel owns the 128 B/edge hot path.
        if atom is None:
            pair = (residue[edge_index[:, 0]] * self.num_residue_type
                    + residue[edge_index[:, 1]])
        elif residue is not None:
            # Faithful to the reference (multiplies by num_residue_type here too).
            # TODO(synk): out-of-range pair ids yield an all-zero row (all-zero
            # one-hot) instead of the IndexError nn.Embedding would raise.
            pair = (residue[edge_index[:, 0]] * self.num_residue_type
                    + atom[edge_index[:, 1]])
        else:
            pair = (atom[edge_index[:, 0]] * self.num_atom_type
                    + atom[edge_index[:, 1]])
        return embedding_gather(pair, self.table_t)


if __name__ == "__main__":
    key = jax.random.PRNGKey(0)
    k_tab, k_res, k_e0, k_e1, k_e2, k_e3 = jax.random.split(key, 6)

    pair_dim = 32
    num_residue_type = 8       # vocab = 64
    n_nodes = 10

    mod = ProteinEdgeFeature(pair_dim, num_atom_type=None,
                             num_residue_type=num_residue_type, key=k_tab)
    residue = jax.random.randint(k_res, (n_nodes,), 0, num_residue_type, jnp.int32)

    def reference(res, ei):
        pair = res[ei[:, 0]] * num_residue_type + res[ei[:, 1]]
        return jnp.take(mod.table, pair, axis=0)

    # Case 1: tiny E (single ragged output tile).
    n_edges = 20
    edge_index = jnp.stack(
        [jax.random.randint(k_e0, (n_edges,), 0, n_nodes, jnp.int32),
         jax.random.randint(k_e1, (n_edges,), 0, n_nodes, jnp.int32)], axis=1)
    out = jax.block_until_ready(mod(residue, edge_index))
    ref = reference(residue, edge_index)
    assert out.shape == (n_edges, pair_dim), out.shape
    assert jnp.allclose(out, ref, atol=1e-5), float(jnp.max(jnp.abs(out - ref)))

    # Case 2: E not a multiple of the tile -> multi-tile grid plus a masked
    # ragged last block (exercises the padding-free output path).
    n_edges2 = 1100
    edge_index2 = jnp.stack(
        [jax.random.randint(k_e2, (n_edges2,), 0, n_nodes, jnp.int32),
         jax.random.randint(k_e3, (n_edges2,), 0, n_nodes, jnp.int32)], axis=1)
    out2 = jax.block_until_ready(mod(residue, edge_index2))
    ref2 = reference(residue, edge_index2)
    assert out2.shape == (n_edges2, pair_dim), out2.shape
    assert jnp.allclose(out2, ref2, atol=1e-5), float(jnp.max(jnp.abs(out2 - ref2)))

    # Case 3: empty edge list.
    out0 = mod(residue, jnp.zeros((0, 2), jnp.int32))
    assert out0.shape == (0, pair_dim), out0.shape

    print("KERNEL_OK")
</pallas_src>

<mosaic_0001>
module attributes {stable_mosaic.version = 11 : i64} {
  func.func @_embedding_gather_kernel(%arg0: i32, %arg1: memref<1x512xi32, #tpu.memory_space<vmem>>, %arg2: memref<32x64xf32, #tpu.memory_space<vmem>>, %arg3: memref<512x32xf32, #tpu.memory_space<vmem>>) attributes {dimension_semantics = [#tpu.dimension_semantics<parallel>], iteration_bounds = array<i64: 1>, scalar_prefetch = 0 : i64, scratch_operands = 0 : i64, tpu.core_type = #tpu.core_type<tc>, window_params = [{transform_indices = @transform_0, window_bounds = array<i64: 1, 512>}, {pipeline_mode = #tpu.pipeline_mode<synchronous>, transform_indices = @transform_1, window_bounds = array<i64: 32, 64>}, {transform_indices = @transform_2, window_bounds = array<i64: 512, 32>}]} {
    %c0 = arith.constant 0 : index
    %c0_0 = arith.constant 0 : index
    %0 = vector.load %arg2[%c0, %c0_0] : memref<32x64xf32, #tpu.memory_space<vmem>>, vector<32x64xf32>
    %c0_1 = arith.constant 0 : index
    %c0_2 = arith.constant 0 : index
    %1 = vector.load %arg1[%c0_1, %c0_2] : memref<1x512xi32, #tpu.memory_space<vmem>>, vector<1x512xi32>
    %2 = tpu.iota {dimensions = array<i32: 0>} : vector<64x512xi32>
    %3 = vector.broadcast %1 : vector<1x512xi32> to vector<64x512xi32>
    %4 = arith.cmpi eq, %2, %3 : vector<64x512xi32>
    %5 = arith.extui %4 : vector<64x512xi1> to vector<64x512xi32>
    %6 = arith.sitofp %5 : vector<64x512xi32> to vector<64x512xf32>
    %cst = arith.constant dense<0.000000e+00> : vector<32x512xf32>
    %7 = tpu.matmul %0, %6, %cst {dimension_numbers = #tpu.dot_dimension_numbers<[1], [0], [0], [1], [0, 0, 1, 1], [], []>, precision = #tpu.contract_precision<fp32>} : vector<32x64xf32>, vector<64x512xf32>, vector<32x512xf32> -> vector<32x512xf32>
    %8 = tpu.transpose %7, [1, 0] : vector<32x512xf32> -> vector<512x32xf32>
    %c0_3 = arith.constant 0 : index
    %c0_4 = arith.constant 0 : index
    %9 = vector.load %arg3[%c0_3, %c0_4] : memref<512x32xf32, #tpu.memory_space<vmem>>, vector<512x32xf32>
    tpu.vector_store %arg3[%c0_3, %c0_4], %8 {strides = array<i32>} : memref<512x32xf32, #tpu.memory_space<vmem>>, vector<512x32xf32>,
    return
  }
  func.func @transform_0(%arg0: i32) -> (i32, i32) {
    %c0_i32 = arith.constant 0 : i32
    %c0_i32_0 = arith.constant 0 : i32
    return %c0_i32, %arg0 : i32, i32
  }
  func.func @transform_1(%arg0: i32) -> (i32, i32) {
    %c0_i32 = arith.constant 0 : i32
    %c0_i32_0 = arith.constant 0 : i32
    %c0_i32_1 = arith.constant 0 : i32
    return %c0_i32, %c0_i32_0 : i32, i32
  }
  func.func @transform_2(%arg0: i32) -> (i32, i32) {
    %c0_i32 = arith.constant 0 : i32
    %c0_i32_0 = arith.constant 0 : i32
    return %arg0, %c0_i32 : i32, i32
  }
}

</mosaic_0001>

<llo_original>
// kernel: tpu_custom_call.1
$region0: #{tpu_custom_call.1}
  #allocation0 [shape = 'u32[]', space=smem, size = 0x4, offset = 0x4, fixed_abs, tag = 'smem constant byte address 0x4 - core index']
  #allocation1 [shape = 'u32[144,128]{1,0:T(1,128)}', space=vmem, size = 0x12000, scoped, tag = 'internal scratch']
  %s0 = inlined_call_operand.hbm [shape: s32[1,512], index: 0, kind: input, shape index: {}]
  %s1 = inlined_call_operand.hbm [shape: f32[32,64], index: 1, kind: input, shape index: {}]
  %s2 = inlined_call_operand.hbm [shape: f32[20,32], index: 2, kind: output, shape index: {}]
  %s3 = sld [smem:[#allocation0]]
  $region26: #{tpu_custom_call.1} parent=0
    _
  %s5 = ssub.s32 1, %s3
  %s6 = scalar_select 0, %s5, %s3
  $region1: #{tpu_custom_call.1} parent=0
    #allocation2 [shape = 'u8[2048]{0}', space=vmem, size = 0x800, scoped, tag = 'input window, operand 0, single buffered']
    #allocation3 [shape = 's32[1]{0}', space=sflag, size = 0x4, scoped, tag = 'scoped memory for tpu_custom_call.1']
    #allocation4 [shape = 's32[1]{0}', space=sflag, size = 0x4, scoped, tag = 'scoped memory for tpu_custom_call.1']
    #allocation5 [shape = 'u8[16384]{0}', space=vmem, size = 0x4000, scoped, tag = 'input window, operand 1, single buffered']
    #allocation6 [shape = 's32[1]{0}', space=sflag, size = 0x4, scoped, tag = 'scoped memory for tpu_custom_call.1']
    #allocation7 [shape = 'u8[262144]{0}', space=vmem, size = 0x40000, scoped, tag = 'output window, operand 0, single buffered']
    %7 = vsyncpa [#allocation3], 0
    %8 = vsyncpa [#allocation6], 0
    %9 = vsyncpa [#allocation4], 0
    // Predicated region
    $region2: #{tpu_custom_call.1} parent=1 // pred_check
      _
    $region3: #{tpu_custom_call.1} parent=1 // pred_check_branch
      %11 = sbr.rel (0) target = $region5
    $region4: #{tpu_custom_call.1} parent=1 // pred_region
      %s13 = ssub.s32 64, 64
      %14 = vsyncadd [#allocation3], %s13
      %s16 = sshll.u32 [#allocation2], 4
      %s17 = int_to_ptr.vmem [resolvable:$true] %s16
      %19 = dma.hbm_to_vmem [thread:$0]  %s0, 64, %s17, [#allocation3]
    $region5: #{tpu_custom_call.1} parent=1 // pred_fallthru
      _
    // Predicated region
    $region6: #{tpu_custom_call.1} parent=1 // pred_check
      _
    $region7: #{tpu_custom_call.1} parent=1 // pred_check_branch
      %21 = sbr.rel (0) target = $region9
    $region8: #{tpu_custom_call.1} parent=1 // pred_region
      %s23 = ssub.s32 512, 512
      %24 = vsyncadd [#allocation6], %s23
      %s25 = sshll.u32 [#allocation5], 4
      %s26 = int_to_ptr.vmem [resolvable:$true] %s25
      %31 = dma.hbm_to_vmem [thread:$0]  %s1, 512, %s26, [#allocation6], 128, 128, 8
    $region9: #{tpu_custom_call.1} parent=1 // pred_fallthru
      _
    // Predicated region
    $region10: #{tpu_custom_call.1} parent=1 // pred_check
      _
    $region11: #{tpu_custom_call.1} parent=1 // pred_check_branch
      %33 = sbr.rel (0) target = $region13
    $region12: #{tpu_custom_call.1} parent=1 // pred_region
      %34 = dma.done [#allocation3], 64
    $region13: #{tpu_custom_call.1} parent=1 // pred_fallthru
      _
    // Predicated region
    $region14: #{tpu_custom_call.1} parent=1 // pred_check
      _
    $region15: #{tpu_custom_call.1} parent=1 // pred_check_branch
      %36 = sbr.rel (0) target = $region17
    $region16: #{tpu_custom_call.1} parent=1 // pred_region
      %37 = dma.done [#allocation6], 512
    $region17: #{tpu_custom_call.1} parent=1 // pred_fallthru
      _
    %v38 = vld [vmem:[#allocation5] sm:$0xff]
    %v39 = vld [vmem:[#allocation5 + $0x8] sm:$0xff]
    %v40 = vld [vmem:[#allocation5 + $0x10] sm:$0xff]
    %v41 = vld [vmem:[#allocation5 + $0x18] sm:$0xff]
    %v42 = vld [vmem:[#allocation2] sm:$0xf]
    %v43 = vlaneseq
    %v44 = vshrl.u32 %v43, 7
    %v45 = vadd.s32 %v44, 8
    %v46 = vadd.s32 %v44, 16
    %v47 = vadd.s32 %v44, 24
    %v48 = vadd.s32 %v44, 32
    %v49 = vadd.s32 %v44, 40
    %v50 = vadd.s32 %v44, 48
    %v51 = vadd.s32 %v44, 56
    %v52 = vlaneseq
    %v53 = vshrl.u32 %v52, 7
    %v54 = vsub.s32 0, %v53
    %v55 = vrot.slane %v42, %v54
    %v56 = vlaneseq
    %v57 = vshrl.u32 %v56, 7
    %v58 = vsub.s32 1, %v57
    %v59 = vrot.slane %v42, %v58
    %v60 = vlaneseq
    %v61 = vshrl.u32 %v60, 7
    %v62 = vsub.s32 2, %v61
    %v63 = vrot.slane %v42, %v62
    %v64 = vlaneseq
    %v65 = vshrl.u32 %v64, 7
    %v66 = vsub.s32 3, %v65
    %v67 = vrot.slane %v42, %v66
    %vm68 = vcmp.eq.s32.totalorder %v44, %v55
    %vm69 = vcmp.eq.s32.totalorder %v44, %v59
    %vm70 = vcmp.eq.s32.totalorder %v44, %v63
    %vm71 = vcmp.eq.s32.totalorder %v44, %v67
    %vm72 = vcmp.eq.s32.totalorder %v45, %v55
    %vm73 = vcmp.eq.s32.totalorder %v45, %v59
    %vm74 = vcmp.eq.s32.totalorder %v45, %v63
    %vm75 = vcmp.eq.s32.totalorder %v45, %v67
    %vm76 = vcmp.eq.s32.totalorder %v46, %v55
    %vm77 = vcmp.eq.s32.totalorder %v46, %v59
    %vm78 = vcmp.eq.s32.totalorder %v46, %v63
    %vm79 = vcmp.eq.s32.totalorder %v46, %v67
    %vm80 = vcmp.eq.s32.totalorder %v47, %v55
    %vm81 = vcmp.eq.s32.totalorder %v47, %v59
    %vm82 = vcmp.eq.s32.totalorder %v47, %v63
    %vm83 = vcmp.eq.s32.totalorder %v47, %v67
    %vm84 = vcmp.eq.s32.totalorder %v48, %v55
    %vm85 = vcmp.eq.s32.totalorder %v48, %v59
    %vm86 = vcmp.eq.s32.totalorder %v48, %v63
    %vm87 = vcmp.eq.s32.totalorder %v48, %v67
    %vm88 = vcmp.eq.s32.totalorder %v49, %v55
    %vm89 = vcmp.eq.s32.totalorder %v49, %v59
    %vm90 = vcmp.eq.s32.totalorder %v49, %v63
    %vm91 = vcmp.eq.s32.totalorder %v49, %v67
    %vm92 = vcmp.eq.s32.totalorder %v50, %v55
    %vm93 = vcmp.eq.s32.totalorder %v50, %v59
    %vm94 = vcmp.eq.s32.totalorder %v50, %v63
    %vm95 = vcmp.eq.s32.totalorder %v50, %v67
    %vm96 = vcmp.eq.s32.totalorder %v51, %v55
    %vm97 = vcmp.eq.s32.totalorder %v51, %v59
    %vm98 = vcmp.eq.s32.totalorder %v51, %v63
    %vm99 = vcmp.eq.s32.totalorder %v51, %v67
    %v100 = vsel %vm68, 1, 0
    %v101 = vsel %vm69, 1, 0
    %v102 = vsel %vm70, 1, 0
    %v103 = vsel %vm71, 1, 0
    %v104 = vsel %vm72, 1, 0
    %v105 = vsel %vm73, 1, 0
    %v106 = vsel %vm74, 1, 0
    %v107 = vsel %vm75, 1, 0
    %v108 = vsel %vm76, 1, 0
    %v109 = vsel %vm77, 1, 0
    %v110 = vsel %vm78, 1, 0
    %v111 = vsel %vm79, 1, 0
    %v112 = vsel %vm80, 1, 0
    %v113 = vsel %vm81, 1, 0
    %v114 = vsel %vm82, 1, 0
    %v115 = vsel %vm83, 1, 0
    %v116 = vsel %vm84, 1, 0
    %v117 = vsel %vm85, 1, 0
    %v118 = vsel %vm86, 1, 0
    %v119 = vsel %vm87, 1, 0
    %v120 = vsel %vm88, 1, 0
    %v121 = vsel %vm89, 1, 0
    %v122 = vsel %vm90, 1, 0
    %v123 = vsel %vm91, 1, 0
    %v124 = vsel %vm92, 1, 0
    %v125 = vsel %vm93, 1, 0
    %v126 = vsel %vm94, 1, 0
    %v127 = vsel %vm95, 1, 0
    %v128 = vsel %vm96, 1, 0
    %v129 = vsel %vm97, 1, 0
    %v130 = vsel %vm98, 1, 0
    %v131 = vsel %vm99, 1, 0
    %v132 = vcvt.s32.f32 %v100
    %v133 = vcvt.s32.f32 %v101
    %v134 = vcvt.s32.f32 %v102
    %v135 = vcvt.s32.f32 %v103
    %v136 = vcvt.s32.f32 %v104
    %v137 = vcvt.s32.f32 %v105
    %v138 = vcvt.s32.f32 %v106
    %v139 = vcvt.s32.f32 %v107
    %v140 = vcvt.s32.f32 %v108
    %v141 = vcvt.s32.f32 %v109
    %v142 = vcvt.s32.f32 %v110
    %v143 = vcvt.s32.f32 %v111
    %v144 = vcvt.s32.f32 %v112
    %v145 = vcvt.s32.f32 %v113
    %v146 = vcvt.s32.f32 %v114
    %v147 = vcvt.s32.f32 %v115
    %v148 = vcvt.s32.f32 %v116
    %v149 = vcvt.s32.f32 %v117
    %v150 = vcvt.s32.f32 %v118
    %v151 = vcvt.s32.f32 %v119
    %v152 = vcvt.s32.f32 %v120
    %v153 = vcvt.s32.f32 %v121
    %v154 = vcvt.s32.f32 %v122
    %v155 = vcvt.s32.f32 %v123
    %v156 = vcvt.s32.f32 %v124
    %v157 = vcvt.s32.f32 %v125
    %v158 = vcvt.s32.f32 %v126
    %v159 = vcvt.s32.f32 %v127
    %v160 = vcvt.s32.f32 %v128
    %v161 = vcvt.s32.f32 %v129
    %v162 = vcvt.s32.f32 %v130
    %v163 = vcvt.s32.f32 %v131
    %vm164 = vcmask 523264
    %v166 = vsel %vm164, %v38, 0
    %v169 = vsel %vm164, %v39, 0
    %v172 = vsel %vm164, %v40, 0
    %v175 = vsel %vm164, %v41, 0
    %v177 = vand.u32 %v133, 4294901760
    %178 = vmatprep.subr.mxu0 %v177
    %v179 = vand.u32 %v132, 4294901760
    %180 = vmatpush1.msra.mxu0 %v179
    %v181 = vand.u32 %v137, 4294901760
    %182 = vmatprep.subr.mxu0 %v181
    %v183 = vand.u32 %v136, 4294901760
    %184 = vmatpush1.msra.mxu0 %v183
    %v185 = vand.u32 %v141, 4294901760
    %186 = vmatprep.subr.mxu0 %v185
    %v187 = vand.u32 %v140, 4294901760
    %188 = vmatpush1.msra.mxu0 %v187
    %v189 = vand.u32 %v145, 4294901760
    %190 = vmatprep.subr.mxu0 %v189
    %v191 = vand.u32 %v144, 4294901760
    %192 = vmatpush1.msra.mxu0 %v191
    %v193 = vand.u32 %v149, 4294901760
    %194 = vmatprep.subr.mxu0 %v193
    %v195 = vand.u32 %v148, 4294901760
    %196 = vmatpush1.msra.mxu0 %v195
    %v197 = vand.u32 %v153, 4294901760
    %198 = vmatprep.subr.mxu0 %v197
    %v199 = vand.u32 %v152, 4294901760
    %200 = vmatpush1.msra.mxu0 %v199
    %v201 = vand.u32 %v157, 4294901760
    %202 = vmatprep.subr.mxu0 %v201
    %v203 = vand.u32 %v156, 4294901760
    %204 = vmatpush1.msra.mxu0 %v203
    %v205 = vand.u32 %v161, 4294901760
    %206 = vmatprep.subr.mxu0 %v205
    %v207 = vand.u32 %v160, 4294901760
    %208 = vmatpush1.msra.mxu0 %v207
    %209 = vmatprep.subr.mxu0 0.0
    %210 = vmatpush1.msra.mxu0 0.0
    %211 = vmatprep.subr.mxu0 0.0
    %212 = vmatpush1.msra.mxu0 0.0
    %213 = vmatprep.subr.mxu0 0.0
    %214 = vmatpush1.msra.mxu0 0.0
    %215 = vmatprep.subr.mxu0 0.0
    %216 = vmatpush1.msra.mxu0 0.0
    %217 = vmatprep.subr.mxu0 0.0
    %218 = vmatpush1.msra.mxu0 0.0
    %219 = vmatprep.subr.mxu0 0.0
    %220 = vmatpush1.msra.mxu0 0.0
    %221 = vmatprep.subr.mxu0 0.0
    %222 = vmatpush1.msra.mxu0 0.0
    %223 = vmatprep.subr.mxu0 0.0
    %224 = vmatpush1.msra.mxu0 0.0
    %225 = vmatprep.subr.mxu0 0.0
    %226 = vmatpush1.msra.mxu0 0.0
    %227 = vmatprep.subr.mxu0 0.0
    %228 = vmatpush1.msra.mxu0 0.0
    %229 = vmatprep.subr.mxu0 0.0
    %230 = vmatpush1.msra.mxu0 0.0
    %231 = vmatprep.subr.mxu0 0.0
    %232 = vmatpush1.msra.mxu0 0.0
    %233 = vmatprep.subr.mxu0 0.0
    %234 = vmatpush1.msra.mxu0 0.0
    %235 = vmatprep.subr.mxu0 0.0
    %236 = vmatpush1.msra.mxu0 0.0
    %237 = vmatprep.subr.mxu0 0.0
    %238 = vmatpush1.msra.mxu0 0.0
    %239 = vmatprep.subr.mxu0 0.0
    %240 = vmatpush1.msra.mxu0 0.0
    %241 = vmatprep.subr.mxu0 0.0
    %242 = vmatpush1.msra.mxu0 0.0
    %243 = vmatprep.subr.mxu0 0.0
    %244 = vmatpush1.msra.mxu0 0.0
    %245 = vmatprep.subr.mxu0 0.0
    %246 = vmatpush1.msra.mxu0 0.0
    %247 = vmatprep.subr.mxu0 0.0
    %248 = vmatpush1.msra.mxu0 0.0
    %249 = vmatprep.subr.mxu0 0.0
    %250 = vmatpush1.msra.mxu0 0.0
    %251 = vmatprep.subr.mxu0 0.0
    %252 = vmatpush1.msra.mxu0 0.0
    %253 = vmatprep.subr.mxu0 0.0
    %254 = vmatpush1.msra.mxu0 0.0
    %255 = vmatprep.subr.mxu0 0.0
    %256 = vmatpush1.msra.mxu0 0.0
    %257 = vmatprep.mubr.f32.mxu0 0.0
    %v258 = vand.u32 %v166, 4294901760
    %v259 = vsub.f32 %v166, %v258
    %v260 = vand.u32 %v259, 4294901760
    %v261 = vsub.f32 %v259, %v260
    %v262 = vand.u32 %v261, 4294901760
    %263 = vmatmul.mubr.f32.gmra.mrb[0].mxu0 %v262
    %v264 = vpop.f32.mrb[0].mxu0
    %v265 = vadd.f32 0.0, %v264
    %v266 = vpop.f32.mrb[0].mxu0
    %v267 = vadd.f32 0.0, %v266
    %268 = vmatprep.mubr.f32.mxu0 0.0
    %v269 = vand.u32 %v169, 4294901760
    %v270 = vsub.f32 %v169, %v269
    %v271 = vand.u32 %v270, 4294901760
    %v272 = vsub.f32 %v270, %v271
    %v273 = vand.u32 %v272, 4294901760
    %274 = vmatmul.mubr.f32.gmra.mrb[0].mxu0 %v273
    %v275 = vpop.f32.mrb[0].mxu0
    %v276 = vadd.f32 0.0, %v275
    %v277 = vpop.f32.mrb[0].mxu0
    %v278 = vadd.f32 0.0, %v277
    %279 = vmatprep.mubr.f32.mxu0 0.0
    %v280 = vand.u32 %v172, 4294901760
    %v281 = vsub.f32 %v172, %v280
    %v282 = vand.u32 %v281, 4294901760
    %v283 = vsub.f32 %v281, %v282
    %v284 = vand.u32 %v283, 4294901760
    %285 = vmatmul.mubr.f32.gmra.mrb[0].mxu0 %v284
    %v286 = vpop.f32.mrb[0].mxu0
    %v287 = vadd.f32 0.0, %v286
    %v288 = vpop.f32.mrb[0].mxu0
    %v289 = vadd.f32 0.0, %v288
    %290 = vmatprep.mubr.f32.mxu0 0.0
    %v291 = vand.u32 %v175, 4294901760
    %v292 = vsub.f32 %v175, %v291
    %v293 = vand.u32 %v292, 4294901760
    %v294 = vsub.f32 %v292, %v293
    %v295 = vand.u32 %v294, 4294901760
    %296 = vmatmul.mubr.f32.gmra.mrb[0].mxu0 %v295
    %v297 = vpop.f32.mrb[0].mxu0
    %v298 = vadd.f32 0.0, %v297
    %v299 = vpop.f32.mrb[0].mxu0
    %v300 = vadd.f32 0.0, %v299
    %301 = vdwg.mxu0
    %v302 = vand.u32 %v133, 4294901760
    %v303 = vsub.f32 %v133, %v302
    %v304 = vand.u32 %v303, 4294901760
    %v305 = vsub.f32 %v303, %v304
    %v306 = vand.u32 %v305, 4294901760
    %307 = vmatprep.subr.mxu0 %v306
    %v308 = vand.u32 %v132, 4294901760
    %v309 = vsub.f32 %v132, %v308
    %v310 = vand.u32 %v309, 4294901760
    %v311 = vsub.f32 %v309, %v310
    %v312 = vand.u32 %v311, 4294901760
    %313 = vmatpush1.msra.mxu0 %v312
    %v314 = vand.u32 %v137, 4294901760
    %v315 = vsub.f32 %v137, %v314
    %v316 = vand.u32 %v315, 4294901760
    %v317 = vsub.f32 %v315, %v316
    %v318 = vand.u32 %v317, 4294901760
    %319 = vmatprep.subr.mxu0 %v318
    %v320 = vand.u32 %v136, 4294901760
    %v321 = vsub.f32 %v136, %v320
    %v322 = vand.u32 %v321, 4294901760
    %v323 = vsub.f32 %v321, %v322
    %v324 = vand.u32 %v323, 4294901760
    %325 = vmatpush1.msra.mxu0 %v324
    %v326 = vand.u32 %v141, 4294901760
    %v327 = vsub.f32 %v141, %v326
    %v328 = vand.u32 %v327, 4294901760
    %v329 = vsub.f32 %v327, %v328
    %v330 = vand.u32 %v329, 4294901760
    %331 = vmatprep.subr.mxu0 %v330
    %v332 = vand.u32 %v140, 4294901760
    %v333 = vsub.f32 %v140, %v332
    %v334 = vand.u32 %v333, 4294901760
    %v335 = vsub.f32 %v333, %v334
    %v336 = vand.u32 %v335, 4294901760
    %337 = vmatpush1.msra.mxu0 %v336
    %v338 = vand.u32 %v145, 4294901760
    %v339 = vsub.f32 %v145, %v338
    %v340 = vand.u32 %v339, 4294901760
    %v341 = vsub.f32 %v339, %v340
    %v342 = vand.u32 %v341, 4294901760
    %343 = vmatprep.subr.mxu0 %v342
    %v344 = vand.u32 %v144, 4294901760
    %v345 = vsub.f32 %v144, %v344
    %v346 = vand.u32 %v345, 4294901760
    %v347 = vsub.f32 %v345, %v346
    %v348 = vand.u32 %v347, 4294901760
    %349 = vmatpush1.msra.mxu0 %v348
    %v350 = vand.u32 %v149, 4294901760
    %v351 = vsub.f32 %v149, %v350
    %v352 = vand.u32 %v351, 4294901760
    %v353 = vsub.f32 %v351, %v352
    %v354 = vand.u32 %v353, 4294901760
    %355 = vmatprep.subr.mxu0 %v354
    %v356 = vand.u32 %v148, 4294901760
    %v357 = vsub.f32 %v148, %v356
    %v358 = vand.u32 %v357, 4294901760
    %v359 = vsub.f32 %v357, %v358
    %v360 = vand.u32 %v359, 4294901760
    %361 = vmatpush1.msra.mxu0 %v360
    %v362 = vand.u32 %v153, 4294901760
    %v363 = vsub.f32 %v153, %v362
    %v364 = vand.u32 %v363, 4294901760
    %v365 = vsub.f32 %v363, %v364
    %v366 = vand.u32 %v365, 4294901760
    %367 = vmatprep.subr.mxu0 %v366
    %v368 = vand.u32 %v152, 4294901760
    %v369 = vsub.f32 %v152, %v368
    %v370 = vand.u32 %v369, 4294901760
    %v371 = vsub.f32 %v369, %v370
    %v372 = vand.u32 %v371, 4294901760
    %373 = vmatpush1.msra.mxu0 %v372
    %v374 = vand.u32 %v157, 4294901760
    %v375 = vsub.f32 %v157, %v374
    %v376 = vand.u32 %v375, 4294901760
    %v377 = vsub.f32 %v375, %v376
    %v378 = vand.u32 %v377, 4294901760
    %379 = vmatprep.subr.mxu0 %v378
    %v380 = vand.u32 %v156, 4294901760
    %v381 = vsub.f32 %v156, %v380
    %v382 = vand.u32 %v381, 4294901760
    %v383 = vsub.f32 %v381, %v382
    %v384 = vand.u32 %v383, 4294901760
    %385 = vmatpush1.msra.mxu0 %v384
    %v386 = vand.u32 %v161, 4294901760
    %v387 = vsub.f32 %v161, %v386
    %v388 = vand.u32 %v387, 4294901760
    %v389 = vsub.f32 %v387, %v388
    %v390 = vand.u32 %v389, 4294901760
    %391 = vmatprep.subr.mxu0 %v390
    %v392 = vand.u32 %v160, 4294901760
    %v393 = vsub.f32 %v160, %v392
    %v394 = vand.u32 %v393, 4294901760
    %v395 = vsub.f32 %v393, %v394
    %v396 = vand.u32 %v395, 4294901760
    %397 = vmatpush1.msra.mxu0 %v396
    %398 = vmatprep.subr.mxu0 0.0
    %399 = vmatpush1.msra.mxu0 0.0
    %400 = vmatprep.subr.mxu0 0.0
    %401 = vmatpush1.msra.mxu0 0.0
    %402 = vmatprep.subr.mxu0 0.0
    %403 = vmatpush1.msra.mxu0 0.0
    %404 = vmatprep.subr.mxu0 0.0
    %405 = vmatpush1.msra.mxu0 0.0
    %406 = vmatprep.subr.mxu0 0.0
    %407 = vmatpush1.msra.mxu0 0.0
    %408 = vmatprep.subr.mxu0 0.0
    %409 = vmatpush1.msra.mxu0 0.0
    %410 = vmatprep.subr.mxu0 0.0
    %411 = vmatpush1.msra.mxu0 0.0
    %412 = vmatprep.subr.mxu0 0.0
    %413 = vmatpush1.msra.mxu0 0.0
    %414 = vmatprep.subr.mxu0 0.0
    %415 = vmatpush1.msra.mxu0 0.0
    %416 = vmatprep.subr.mxu0 0.0
    %417 = vmatpush1.msra.mxu0 0.0
    %418 = vmatprep.subr.mxu0 0.0
    %419 = vmatpush1.msra.mxu0 0.0
    %420 = vmatprep.subr.mxu0 0.0
    %421 = vmatpush1.msra.mxu0 0.0
    %422 = vmatprep.subr.mxu0 0.0
    %423 = vmatpush1.msra.mxu0 0.0
    %424 = vmatprep.subr.mxu0 0.0
    %425 = vmatpush1.msra.mxu0 0.0
    %426 = vmatprep.subr.mxu0 0.0
    %427 = vmatpush1.msra.mxu0 0.0
    %428 = vmatprep.subr.mxu0 0.0
    %429 = vmatpush1.msra.mxu0 0.0
    %430 = vmatprep.subr.mxu0 0.0
    %431 = vmatpush1.msra.mxu0 0.0
    %432 = vmatprep.subr.mxu0 0.0
    %433 = vmatpush1.msra.mxu0 0.0
    %434 = vmatprep.subr.mxu0 0.0
    %435 = vmatpush1.msra.mxu0 0.0
    %436 = vmatprep.subr.mxu0 0.0
    %437 = vmatpush1.msra.mxu0 0.0
    %438 = vmatprep.subr.mxu0 0.0
    %439 = vmatpush1.msra.mxu0 0.0
    %440 = vmatprep.subr.mxu0 0.0
    %441 = vmatpush1.msra.mxu0 0.0
    %442 = vmatprep.subr.mxu0 0.0
    %443 = vmatpush1.msra.mxu0 0.0
    %444 = vmatprep.subr.mxu0 0.0
    %445 = vmatpush1.msra.mxu0 0.0
    %446 = vmatprep.mubr.f32.mxu0 0.0
    %v447 = vand.u32 %v166, 4294901760
    %448 = vmatmul.mubr.f32.gmra.mrb[0].mxu0 %v447
    %v449 = vpop.f32.mrb[0].mxu0
    %v450 = vadd.f32 %v265, %v449
    %v451 = vpop.f32.mrb[0].mxu0
    %v452 = vadd.f32 %v267, %v451
    %453 = vmatprep.mubr.f32.mxu0 0.0
    %v454 = vand.u32 %v169, 4294901760
    %455 = vmatmul.mubr.f32.gmra.mrb[0].mxu0 %v454
    %v456 = vpop.f32.mrb[0].mxu0
    %v457 = vadd.f32 %v276, %v456
    %v458 = vpop.f32.mrb[0].mxu0
    %v459 = vadd.f32 %v278, %v458
    %460 = vmatprep.mubr.f32.mxu0 0.0
    %v461 = vand.u32 %v172, 4294901760
    %462 = vmatmul.mubr.f32.gmra.mrb[0].mxu0 %v461
    %v463 = vpop.f32.mrb[0].mxu0
    %v464 = vadd.f32 %v287, %v463
    %v465 = vpop.f32.mrb[0].mxu0
    %v466 = vadd.f32 %v289, %v465
    %467 = vmatprep.mubr.f32.mxu0 0.0
    %v468 = vand.u32 %v175, 4294901760
    %469 = vmatmul.mubr.f32.gmra.mrb[0].mxu0 %v468
    %v470 = vpop.f32.mrb[0].mxu0
    %v471 = vadd.f32 %v298, %v470
    %v472 = vpop.f32.mrb[0].mxu0
    %v473 = vadd.f32 %v300, %v472
    %474 = vdwg.mxu0
    %v475 = vand.u32 %v133, 4294901760
    %v476 = vsub.f32 %v133, %v475
    %477 = vmatprep.subr.mxu0 %v476
    %v478 = vand.u32 %v132, 4294901760
    %v479 = vsub.f32 %v132, %v478
    %480 = vmatpush1.msra.mxu0 %v479
    %v481 = vand.u32 %v137, 4294901760
    %v482 = vsub.f32 %v137, %v481
    %483 = vmatprep.subr.mxu0 %v482
    %v484 = vand.u32 %v136, 4294901760
    %v485 = vsub.f32 %v136, %v484
    %486 = vmatpush1.msra.mxu0 %v485
    %v487 = vand.u32 %v141, 4294901760
    %v488 = vsub.f32 %v141, %v487
    %489 = vmatprep.subr.mxu0 %v488
    %v490 = vand.u32 %v140, 4294901760
    %v491 = vsub.f32 %v140, %v490
    %492 = vmatpush1.msra.mxu0 %v491
    %v493 = vand.u32 %v145, 4294901760
    %v494 = vsub.f32 %v145, %v493
    %495 = vmatprep.subr.mxu0 %v494
    %v496 = vand.u32 %v144, 4294901760
    %v497 = vsub.f32 %v144, %v496
    %498 = vmatpush1.msra.mxu0 %v497
    %v499 = vand.u32 %v149, 4294901760
    %v500 = vsub.f32 %v149, %v499
    %501 = vmatprep.subr.mxu0 %v500
    %v502 = vand.u32 %v148, 4294901760
    %v503 = vsub.f32 %v148, %v502
    %504 = vmatpush1.msra.mxu0 %v503
    %v505 = vand.u32 %v153, 4294901760
    %v506 = vsub.f32 %v153, %v505
    %507 = vmatprep.subr.mxu0 %v506
    %v508 = vand.u32 %v152, 4294901760
    %v509 = vsub.f32 %v152, %v508
    %510 = vmatpush1.msra.mxu0 %v509
    %v511 = vand.u32 %v157, 4294901760
    %v512 = vsub.f32 %v157, %v511
    %513 = vmatprep.subr.mxu0 %v512
    %v514 = vand.u32 %v156, 4294901760
    %v515 = vsub.f32 %v156, %v514
    %516 = vmatpush1.msra.mxu0 %v515
    %v517 = vand.u32 %v161, 4294901760
    %v518 = vsub.f32 %v161, %v517
    %519 = vmatprep.subr.mxu0 %v518
    %v520 = vand.u32 %v160, 4294901760
    %v521 = vsub.f32 %v160, %v520
    %522 = vmatpush1.msra.mxu0 %v521
    %523 = vmatprep.subr.mxu0 0.0
    %524 = vmatpush1.msra.mxu0 0.0
    %525 = vmatprep.subr.mxu0 0.0
    %526 = vmatpush1.msra.mxu0 0.0
    %527 = vmatprep.subr.mxu0 0.0
    %528 = vmatpush1.msra.mxu0 0.0
    %529 = vmatprep.subr.mxu0 0.0
    %530 = vmatpush1.msra.mxu0 0.0
    %531 = vmatprep.subr.mxu0 0.0
    %532 = vmatpush1.msra.mxu0 0.0
    %533 = vmatprep.subr.mxu0 0.0
    %534 = vmatpush1.msra.mxu0 0.0
    %535 = vmatprep.subr.mxu0 0.0
    %536 = vmatpush1.msra.mxu0 0.0
    %537 = vmatprep.subr.mxu0 0.0
    %538 = vmatpush1.msra.mxu0 0.0
    %539 = vmatprep.subr.mxu0 0.0
    %540 = vmatpush1.msra.mxu0 0.0
    %541 = vmatprep.subr.mxu0 0.0
    %542 = vmatpush1.msra.mxu0 0.0
    %543 = vmatprep.subr.mxu0 0.0
    %544 = vmatpush1.msra.mxu0 0.0
    %545 = vmatprep.subr.mxu0 0.0
    %546 = vmatpush1.msra.mxu0 0.0
    %547 = vmatprep.subr.mxu0 0.0
    %548 = vmatpush1.msra.mxu0 0.0
    %549 = vmatprep.subr.mxu0 0.0
    %550 = vmatpush1.msra.mxu0 0.0
    %551 = vmatprep.subr.mxu0 0.0
    %552 = vmatpush1.msra.mxu0 0.0
    %553 = vmatprep.subr.mxu0 0.0
    %554 = vmatpush1.msra.mxu0 0.0
    %555 = vmatprep.subr.mxu0 0.0
    %556 = vmatpush1.msra.mxu0 0.0
    %557 = vmatprep.subr.mxu0 0.0
    %558 = vmatpush1.msra.mxu0 0.0
    %559 = vmatprep.subr.mxu0 0.0
    %560 = vmatpush1.msra.mxu0 0.0
    %561 = vmatprep.subr.mxu0 0.0
    %562 = vmatpush1.msra.mxu0 0.0
    %563 = vmatprep.subr.mxu0 0.0
    %564 = vmatpush1.msra.mxu0 0.0
    %565 = vmatprep.subr.mxu0 0.0
    %566 = vmatpush1.msra.mxu0 0.0
    %567 = vmatprep.subr.mxu0 0.0
    %568 = vmatpush1.msra.mxu0 0.0
    %569 = vmatprep.subr.mxu0 0.0
    %570 = vmatpush1.msra.mxu0 0.0
    %571 = vmatprep.mubr.f32.mxu0 0.0
    %v572 = vand.u32 %v166, 4294901760
    %v573 = vsub.f32 %v166, %v572
    %574 = vmatmul.mubr.f32.gmra.mrb[0].mxu0 %v573
    %v575 = vpop.f32.mrb[0].mxu0
    %v576 = vadd.f32 %v450, %v575
    %v577 = vpop.f32.mrb[0].mxu0
    %v578 = vadd.f32 %v452, %v577
    %579 = vmatprep.mubr.f32.mxu0 0.0
    %v580 = vand.u32 %v169, 4294901760
    %v581 = vsub.f32 %v169, %v580
    %582 = vmatmul.mubr.f32.gmra.mrb[0].mxu0 %v581
    %v583 = vpop.f32.mrb[0].mxu0
    %v584 = vadd.f32 %v457, %v583
    %v585 = vpop.f32.mrb[0].mxu0
    %v586 = vadd.f32 %v459, %v585
    %587 = vmatprep.mubr.f32.mxu0 0.0
    %v588 = vand.u32 %v172, 4294901760
    %v589 = vsub.f32 %v172, %v588
    %590 = vmatmul.mubr.f32.gmra.mrb[0].mxu0 %v589
    %v591 = vpop.f32.mrb[0].mxu0
    %v592 = vadd.f32 %v464, %v591
    %v593 = vpop.f32.mrb[0].mxu0
    %v594 = vadd.f32 %v466, %v593
    %595 = vmatprep.mubr.f32.mxu0 0.0
    %v596 = vand.u32 %v175, 4294901760
    %v597 = vsub.f32 %v175, %v596
    %598 = vmatmul.mubr.f32.gmra.mrb[0].mxu0 %v597
    %v599 = vpop.f32.mrb[0].mxu0
    %v600 = vadd.f32 %v471, %v599
    %v601 = vpop.f32.mrb[0].mxu0
    %v602 = vadd.f32 %v473, %v601
    %603 = vdwg.mxu0
    %v604 = vand.u32 %v133, 4294901760
    %605 = vmatprep.subr.mxu0 %v604
    %v606 = vand.u32 %v132, 4294901760
    %607 = vmatpush1.msra.mxu0 %v606
    %v608 = vand.u32 %v137, 4294901760
    %609 = vmatprep.subr.mxu0 %v608
    %v610 = vand.u32 %v136, 4294901760
    %611 = vmatpush1.msra.mxu0 %v610
    %v612 = vand.u32 %v141, 4294901760
    %613 = vmatprep.subr.mxu0 %v612
    %v614 = vand.u32 %v140, 4294901760
    %615 = vmatpush1.msra.mxu0 %v614
    %v616 = vand.u32 %v145, 4294901760
    %617 = vmatprep.subr.mxu0 %v616
    %v618 = vand.u32 %v144, 4294901760
    %619 = vmatpush1.msra.mxu0 %v618
    %v620 = vand.u32 %v149, 4294901760
    %621 = vmatprep.subr.mxu0 %v620
    %v622 = vand.u32 %v148, 4294901760
    %623 = vmatpush1.msra.mxu0 %v622
    %v624 = vand.u32 %v153, 4294901760
    %625 = vmatprep.subr.mxu0 %v624
    %v626 = vand.u32 %v152, 4294901760
    %627 = vmatpush1.msra.mxu0 %v626
    %v628 = vand.u32 %v157, 4294901760
    %629 = vmatprep.subr.mxu0 %v628
    %v630 = vand.u32 %v156, 4294901760
    %631 = vmatpush1.msra.mxu0 %v630
    %v632 = vand.u32 %v161, 4294901760
    %633 = vmatprep.subr.mxu0 %v632
    %v634 = vand.u32 %v160, 4294901760
    %635 = vmatpush1.msra.mxu0 %v634
    %636 = vmatprep.subr.mxu0 0.0
    %637 = vmatpush1.msra.mxu0 0.0
    %638 = vmatprep.subr.mxu0 0.0
    %639 = vmatpush1.msra.mxu0 0.0
    %640 = vmatprep.subr.mxu0 0.0
    %641 = vmatpush1.msra.mxu0 0.0
    %642 = vmatprep.subr.mxu0 0.0
    %643 = vmatpush1.msra.mxu0 0.0
    %644 = vmatprep.subr.mxu0 0.0
    %645 = vmatpush1.msra.mxu0 0.0
    %646 = vmatprep.subr.mxu0 0.0
    %647 = vmatpush1.msra.mxu0 0.0
    %648 = vmatprep.subr.mxu0 0.0
    %649 = vmatpush1.msra.mxu0 0.0
    %650 = vmatprep.subr.mxu0 0.0
    %651 = vmatpush1.msra.mxu0 0.0
    %652 = vmatprep.subr.mxu0 0.0
    %653 = vmatpush1.msra.mxu0 0.0
    %654 = vmatprep.subr.mxu0 0.0
    %655 = vmatpush1.msra.mxu0 0.0
    %656 = vmatprep.subr.mxu0 0.0
    %657 = vmatpush1.msra.mxu0 0.0
    %658 = vmatprep.subr.mxu0 0.0
    %659 = vmatpush1.msra.mxu0 0.0
    %660 = vmatprep.subr.mxu0 0.0
    %661 = vmatpush1.msra.mxu0 0.0
    %662 = vmatprep.subr.mxu0 0.0
    %663 = vmatpush1.msra.mxu0 0.0
    %664 = vmatprep.subr.mxu0 0.0
    %665 = vmatpush1.msra.mxu0 0.0
    %666 = vmatprep.subr.mxu0 0.0
    %667 = vmatpush1.msra.mxu0 0.0
    %668 = vmatprep.subr.mxu0 0.0
    %669 = vmatpush1.msra.mxu0 0.0
    %670 = vmatprep.subr.mxu0 0.0
    %671 = vmatpush1.msra.mxu0 0.0
    %672 = vmatprep.subr.mxu0 0.0
    %673 = vmatpush1.msra.mxu0 0.0
    %674 = vmatprep.subr.mxu0 0.0
    %675 = vmatpush1.msra.mxu0 0.0
    %676 = vmatprep.subr.mxu0 0.0
    %677 = vmatpush1.msra.mxu0 0.0
    %678 = vmatprep.subr.mxu0 0.0
    %679 = vmatpush1.msra.mxu0 0.0
    %680 = vmatprep.subr.mxu0 0.0
    %681 = vmatpush1.msra.mxu0 0.0
    %682 = vmatprep.subr.mxu0 0.0
    %683 = vmatpush1.msra.mxu0 0.0
    %684 = vmatprep.mubr.f32.mxu0 0.0
    %v685 = vand.u32 %v166, 4294901760
    %v686 = vsub.f32 %v166, %v685
    %v687 = vand.u32 %v686, 4294901760
    %688 = vmatmul.mubr.f32.gmra.mrb[0].mxu0 %v687
    %v689 = vpop.f32.mrb[0].mxu0
    %v690 = vadd.f32 %v576, %v689
    %v691 = vpop.f32.mrb[0].mxu0
    %v692 = vadd.f32 %v578, %v691
    %693 = vmatprep.mubr.f32.mxu0 0.0
    %v694 = vand.u32 %v169, 4294901760
    %v695 = vsub.f32 %v169, %v694
    %v696 = vand.u32 %v695, 4294901760
    %697 = vmatmul.mubr.f32.gmra.mrb[0].mxu0 %v696
    %v698 = vpop.f32.mrb[0].mxu0
    %v699 = vadd.f32 %v584, %v698
    %v700 = vpop.f32.mrb[0].mxu0
    %v701 = vadd.f32 %v586, %v700
    %702 = vmatprep.mubr.f32.mxu0 0.0
    %v703 = vand.u32 %v172, 4294901760
    %v704 = vsub.f32 %v172, %v703
    %v705 = vand.u32 %v704, 4294901760
    %706 = vmatmul.mubr.f32.gmra.mrb[0].mxu0 %v705
    %v707 = vpop.f32.mrb[0].mxu0
    %v708 = vadd.f32 %v592, %v707
    %v709 = vpop.f32.mrb[0].mxu0
    %v710 = vadd.f32 %v594, %v709
    %711 = vmatprep.mubr.f32.mxu0 0.0
    %v712 = vand.u32 %v175, 4294901760
    %v713 = vsub.f32 %v175, %v712
    %v714 = vand.u32 %v713, 4294901760
    %715 = vmatmul.mubr.f32.gmra.mrb[0].mxu0 %v714
    %v716 = vpop.f32.mrb[0].mxu0
    %v717 = vadd.f32 %v600, %v716
    %v718 = vpop.f32.mrb[0].mxu0
    %v719 = vadd.f32 %v602, %v718
    %720 = vdwg.mxu0
    %v721 = vand.u32 %v133, 4294901760
    %v722 = vsub.f32 %v133, %v721
    %v723 = vand.u32 %v722, 4294901760
    %724 = vmatprep.subr.mxu0 %v723
    %v725 = vand.u32 %v132, 4294901760
    %v726 = vsub.f32 %v132, %v725
    %v727 = vand.u32 %v726, 4294901760
    %728 = vmatpush1.msra.mxu0 %v727
    %v729 = vand.u32 %v137, 4294901760
    %v730 = vsub.f32 %v137, %v729
    %v731 = vand.u32 %v730, 4294901760
    %732 = vmatprep.subr.mxu0 %v731
    %v733 = vand.u32 %v136, 4294901760
    %v734 = vsub.f32 %v136, %v733
    %v735 = vand.u32 %v734, 4294901760
    %736 = vmatpush1.msra.mxu0 %v735
    %v737 = vand.u32 %v141, 4294901760
    %v738 = vsub.f32 %v141, %v737
    %v739 = vand.u32 %v738, 4294901760
    %740 = vmatprep.subr.mxu0 %v739
    %v741 = vand.u32 %v140, 4294901760
    %v742 = vsub.f32 %v140, %v741
    %v743 = vand.u32 %v742, 4294901760
    %744 = vmatpush1.msra.mxu0 %v743
    %v745 = vand.u32 %v145, 4294901760
    %v746 = vsub.f32 %v145, %v745
    %v747 = vand.u32 %v746, 4294901760
    %748 = vmatprep.subr.mxu0 %v747
    %v749 = vand.u32 %v144, 4294901760
    %v750 = vsub.f32 %v144, %v749
    %v751 = vand.u32 %v750, 4294901760
    %752 = vmatpush1.msra.mxu0 %v751
    %v753 = vand.u32 %v149, 4294901760
    %v754 = vsub.f32 %v149, %v753
    %v755 = vand.u32 %v754, 4294901760
    %756 = vmatprep.subr.mxu0 %v755
    %v757 = vand.u32 %v148, 4294901760
    %v758 = vsub.f32 %v148, %v757
    %v759 = vand.u32 %v758, 4294901760
    %760 = vmatpush1.msra.mxu0 %v759
    %v761 = vand.u32 %v153, 4294901760
    %v762 = vsub.f32 %v153, %v761
    %v763 = vand.u32 %v762, 4294901760
    %764 = vmatprep.subr.mxu0 %v763
    %v765 = vand.u32 %v152, 4294901760
    %v766 = vsub.f32 %v152, %v765
    %v767 = vand.u32 %v766, 4294901760
    %768 = vmatpush1.msra.mxu0 %v767
    %v769 = vand.u32 %v157, 4294901760
    %v770 = vsub.f32 %v157, %v769
    %v771 = vand.u32 %v770, 4294901760
    %772 = vmatprep.subr.mxu0 %v771
    %v773 = vand.u32 %v156, 4294901760
    %v774 = vsub.f32 %v156, %v773
    %v775 = vand.u32 %v774, 4294901760
    %776 = vmatpush1.msra.mxu0 %v775
    %v777 = vand.u32 %v161, 4294901760
    %v778 = vsub.f32 %v161, %v777
    %v779 = vand.u32 %v778, 4294901760
    %780 = vmatprep.subr.mxu0 %v779
    %v781 = vand.u32 %v160, 4294901760
    %v782 = vsub.f32 %v160, %v781
    %v783 = vand.u32 %v782, 4294901760
    %784 = vmatpush1.msra.mxu0 %v783
    %785 = vmatprep.subr.mxu0 0.0
    %786 = vmatpush1.msra.mxu0 0.0
    %787 = vmatprep.subr.mxu0 0.0
    %788 = vmatpush1.msra.mxu0 0.0
    %789 = vmatprep.subr.mxu0 0.0
    %790 = vmatpush1.msra.mxu0 0.0
    %791 = vmatprep.subr.mxu0 0.0
    %792 = vmatpush1.msra.mxu0 0.0
    %793 = vmatprep.subr.mxu0 0.0
    %794 = vmatpush1.msra.mxu0 0.0
    %795 = vmatprep.subr.mxu0 0.0
    %796 = vmatpush1.msra.mxu0 0.0
    %797 = vmatprep.subr.mxu0 0.0
    %798 = vmatpush1.msra.mxu0 0.0
    %799 = vmatprep.subr.mxu0 0.0
    %800 = vmatpush1.msra.mxu0 0.0
    %801 = vmatprep.subr.mxu0 0.0
    %802 = vmatpush1.msra.mxu0 0.0
    %803 = vmatprep.subr.mxu0 0.0
    %804 = vmatpush1.msra.mxu0 0.0
    %805 = vmatprep.subr.mxu0 0.0
    %806 = vmatpush1.msra.mxu0 0.0
    %807 = vmatprep.subr.mxu0 0.0
    %808 = vmatpush1.msra.mxu0 0.0
    %809 = vmatprep.subr.mxu0 0.0
    %810 = vmatpush1.msra.mxu0 0.0
    %811 = vmatprep.subr.mxu0 0.0
    %812 = vmatpush1.msra.mxu0 0.0
    %813 = vmatprep.subr.mxu0 0.0
    %814 = vmatpush1.msra.mxu0 0.0
    %815 = vmatprep.subr.mxu0 0.0
    %816 = vmatpush1.msra.mxu0 0.0
    %817 = vmatprep.subr.mxu0 0.0
    %818 = vmatpush1.msra.mxu0 0.0
    %819 = vmatprep.subr.mxu0 0.0
    %820 = vmatpush1.msra.mxu0 0.0
    %821 = vmatprep.subr.mxu0 0.0
    %822 = vmatpush1.msra.mxu0 0.0
    %823 = vmatprep.subr.mxu0 0.0
    %824 = vmatpush1.msra.mxu0 0.0
    %825 = vmatprep.subr.mxu0 0.0
    %826 = vmatpush1.msra.mxu0 0.0
    %827 = vmatprep.subr.mxu0 0.0
    %828 = vmatpush1.msra.mxu0 0.0
    %829 = vmatprep.subr.mxu0 0.0
    %830 = vmatpush1.msra.mxu0 0.0
    %831 = vmatprep.subr.mxu0 0.0
    %832 = vmatpush1.msra.mxu0 0.0
    %833 = vmatprep.mubr.f32.mxu0 0.0
    %v834 = vand.u32 %v166, 4294901760
    %835 = vmatmul.mubr.f32.gmra.mrb[0].mxu0 %v834
    %v836 = vpop.f32.mrb[0].mxu0
    %v837 = vadd.f32 %v690, %v836
    %v838 = vpop.f32.mrb[0].mxu0
    %v839 = vadd.f32 %v692, %v838
    %840 = vmatprep.mubr.f32.mxu0 0.0
    %v841 = vand.u32 %v169, 4294901760
    %842 = vmatmul.mubr.f32.gmra.mrb[0].mxu0 %v841
    %v843 = vpop.f32.mrb[0].mxu0
    %v844 = vadd.f32 %v699, %v843
    %v845 = vpop.f32.mrb[0].mxu0
    %v846 = vadd.f32 %v701, %v845
    %847 = vmatprep.mubr.f32.mxu0 0.0
    %v848 = vand.u32 %v172, 4294901760
    %849 = vmatmul.mubr.f32.gmra.mrb[0].mxu0 %v848
    %v850 = vpop.f32.mrb[0].mxu0
    %v851 = vadd.f32 %v708, %v850
    %v852 = vpop.f32.mrb[0].mxu0
    %v853 = vadd.f32 %v710, %v852
    %854 = vmatprep.mubr.f32.mxu0 0.0
    %v855 = vand.u32 %v175, 4294901760
    %856 = vmatmul.mubr.f32.gmra.mrb[0].mxu0 %v855
    %v857 = vpop.f32.mrb[0].mxu0
    %v858 = vadd.f32 %v717, %v857
    %v859 = vpop.f32.mrb[0].mxu0
    %v860 = vadd.f32 %v719, %v859
    %861 = vdwg.mxu0
    %v862 = vand.u32 %v133, 4294901760
    %863 = vmatprep.subr.mxu0 %v862
    %v864 = vand.u32 %v132, 4294901760
    %865 = vmatpush1.msra.mxu0 %v864
    %v866 = vand.u32 %v137, 4294901760
    %867 = vmatprep.subr.mxu0 %v866
    %v868 = vand.u32 %v136, 4294901760
    %869 = vmatpush1.msra.mxu0 %v868
    %v870 = vand.u32 %v141, 4294901760
    %871 = vmatprep.subr.mxu0 %v870
    %v872 = vand.u32 %v140, 4294901760
    %873 = vmatpush1.msra.mxu0 %v872
    %v874 = vand.u32 %v145, 4294901760
    %875 = vmatprep.subr.mxu0 %v874
    %v876 = vand.u32 %v144, 4294901760
    %877 = vmatpush1.msra.mxu0 %v876
    %v878 = vand.u32 %v149, 4294901760
    %879 = vmatprep.subr.mxu0 %v878
    %v880 = vand.u32 %v148, 4294901760
    %881 = vmatpush1.msra.mxu0 %v880
    %v882 = vand.u32 %v153, 4294901760
    %883 = vmatprep.subr.mxu0 %v882
    %v884 = vand.u32 %v152, 4294901760
    %885 = vmatpush1.msra.mxu0 %v884
    %v886 = vand.u32 %v157, 4294901760
    %887 = vmatprep.subr.mxu0 %v886
    %v888 = vand.u32 %v156, 4294901760
    %889 = vmatpush1.msra.mxu0 %v888
    %v890 = vand.u32 %v161, 4294901760
    %891 = vmatprep.subr.mxu0 %v890
    %v892 = vand.u32 %v160, 4294901760
    %893 = vmatpush1.msra.mxu0 %v892
    %894 = vmatprep.subr.mxu0 0.0
    %895 = vmatpush1.msra.mxu0 0.0
    %896 = vmatprep.subr.mxu0 0.0
    %897 = vmatpush1.msra.mxu0 0.0
    %898 = vmatprep.subr.mxu0 0.0
    %899 = vmatpush1.msra.mxu0 0.0
    %900 = vmatprep.subr.mxu0 0.0
    %901 = vmatpush1.msra.mxu0 0.0
    %902 = vmatprep.subr.mxu0 0.0
    %903 = vmatpush1.msra.mxu0 0.0
    %904 = vmatprep.subr.mxu0 0.0
    %905 = vmatpush1.msra.mxu0 0.0
    %906 = vmatprep.subr.mxu0 0.0
    %907 = vmatpush1.msra.mxu0 0.0
    %908 = vmatprep.subr.mxu0 0.0
    %909 = vmatpush1.msra.mxu0 0.0
    %910 = vmatprep.subr.mxu0 0.0
    %911 = vmatpush1.msra.mxu0 0.0
    %912 = vmatprep.subr.mxu0 0.0
    %913 = vmatpush1.msra.mxu0 0.0
    %914 = vmatprep.subr.mxu0 0.0
    %915 = vmatpush1.msra.mxu0 0.0
    %916 = vmatprep.subr.mxu0 0.0
    %917 = vmatpush1.msra.mxu0 0.0
    %918 = vmatprep.subr.mxu0 0.0
    %919 = vmatpush1.msra.mxu0 0.0
    %920 = vmatprep.subr.mxu0 0.0
    %921 = vmatpush1.msra.mxu0 0.0
    %922 = vmatprep.subr.mxu0 0.0
    %923 = vmatpush1.msra.mxu0 0.0
    %924 = vmatprep.subr.mxu0 0.0
    %925 = vmatpush1.msra.mxu0 0.0
    %926 = vmatprep.subr.mxu0 0.0
    %927 = vmatpush1.msra.mxu0 0.0
    %928 = vmatprep.subr.mxu0 0.0
    %929 = vmatpush1.msra.mxu0 0.0
    %930 = vmatprep.subr.mxu0 0.0
    %931 = vmatpush1.msra.mxu0 0.0
    %932 = vmatprep.subr.mxu0 0.0
    %933 = vmatpush1.msra.mxu0 0.0
    %934 = vmatprep.subr.mxu0 0.0
    %935 = vmatpush1.msra.mxu0 0.0
    %936 = vmatprep.subr.mxu0 0.0
    %937 = vmatpush1.msra.mxu0 0.0
    %938 = vmatprep.subr.mxu0 0.0
    %939 = vmatpush1.msra.mxu0 0.0
    %940 = vmatprep.subr.mxu0 0.0
    %941 = vmatpush1.msra.mxu0 0.0
    %942 = vmatprep.mubr.f32.mxu0 0.0
    %v943 = vand.u32 %v166, 4294901760
    %944 = vmatmul.mubr.f32.gmra.mrb[0].mxu0 %v943
    %v945 = vpop.f32.mrb[0].mxu0
    %v946 = vadd.f32 %v837, %v945
    %v947 = vpop.f32.mrb[0].mxu0
    %v948 = vadd.f32 %v839, %v947
    %949 = vmatprep.mubr.f32.mxu0 0.0
    %v950 = vand.u32 %v169, 4294901760
    %951 = vmatmul.mubr.f32.gmra.mrb[0].mxu0 %v950
    %v952 = vpop.f32.mrb[0].mxu0
    %v953 = vadd.f32 %v844, %v952
    %v954 = vpop.f32.mrb[0].mxu0
    %v955 = vadd.f32 %v846, %v954
    %956 = vmatprep.mubr.f32.mxu0 0.0
    %v957 = vand.u32 %v172, 4294901760
    %958 = vmatmul.mubr.f32.gmra.mrb[0].mxu0 %v957
    %v959 = vpop.f32.mrb[0].mxu0
    %v960 = vadd.f32 %v851, %v959
    %v961 = vpop.f32.mrb[0].mxu0
    %v962 = vadd.f32 %v853, %v961
    %963 = vmatprep.mubr.f32.mxu0 0.0
    %v964 = vand.u32 %v175, 4294901760
    %965 = vmatmul.mubr.f32.gmra.mrb[0].mxu0 %v964
    %v966 = vpop.f32.mrb[0].mxu0
    %v967 = vadd.f32 %v858, %v966
    %v968 = vpop.f32.mrb[0].mxu0
    %v969 = vadd.f32 %v860, %v968
    %970 = vdwg.mxu0
    %v971 = vand.u32 %v135, 4294901760
    %972 = vmatprep.subr.mxu0 %v971
    %v973 = vand.u32 %v134, 4294901760
    %974 = vmatpush1.msra.mxu0 %v973
    %v975 = vand.u32 %v139, 4294901760
    %976 = vmatprep.subr.mxu0 %v975
    %v977 = vand.u32 %v138, 4294901760
    %978 = vmatpush1.msra.mxu0 %v977
    %v979 = vand.u32 %v143, 4294901760
    %980 = vmatprep.subr.mxu0 %v979
    %v981 = vand.u32 %v142, 4294901760
    %982 = vmatpush1.msra.mxu0 %v981
    %v983 = vand.u32 %v147, 4294901760
    %984 = vmatprep.subr.mxu0 %v983
    %v985 = vand.u32 %v146, 4294901760
    %986 = vmatpush1.msra.mxu0 %v985
    %v987 = vand.u32 %v151, 4294901760
    %988 = vmatprep.subr.mxu0 %v987
    %v989 = vand.u32 %v150, 4294901760
    %990 = vmatpush1.msra.mxu0 %v989
    %v991 = vand.u32 %v155, 4294901760
    %992 = vmatprep.subr.mxu0 %v991
    %v993 = vand.u32 %v154, 4294901760
    %994 = vmatpush1.msra.mxu0 %v993
    %v995 = vand.u32 %v159, 4294901760
    %996 = vmatprep.subr.mxu0 %v995
    %v997 = vand.u32 %v158, 4294901760
    %998 = vmatpush1.msra.mxu0 %v997
    %v999 = vand.u32 %v163, 4294901760
    %1000 = vmatprep.subr.mxu0 %v999
    %v1001 = vand.u32 %v162, 4294901760
    %1002 = vmatpush1.msra.mxu0 %v1001
    %1003 = vmatprep.subr.mxu0 0.0
    %1004 = vmatpush1.msra.mxu0 0.0
    %1005 = vmatprep.subr.mxu0 0.0
    %1006 = vmatpush1.msra.mxu0 0.0
    %1007 = vmatprep.subr.mxu0 0.0
    %1008 = vmatpush1.msra.mxu0 0.0
    %1009 = vmatprep.subr.mxu0 0.0
    %1010 = vmatpush1.msra.mxu0 0.0
    %1011 = vmatprep.subr.mxu0 0.0
    %1012 = vmatpush1.msra.mxu0 0.0
    %1013 = vmatprep.subr.mxu0 0.0
    %1014 = vmatpush1.msra.mxu0 0.0
    %1015 = vmatprep.subr.mxu0 0.0
    %1016 = vmatpush1.msra.mxu0 0.0
    %1017 = vmatprep.subr.mxu0 0.0
    %1018 = vmatpush1.msra.mxu0 0.0
    %1019 = vmatprep.subr.mxu0 0.0
    %1020 = vmatpush1.msra.mxu0 0.0
    %1021 = vmatprep.subr.mxu0 0.0
    %1022 = vmatpush1.msra.mxu0 0.0
    %1023 = vmatprep.subr.mxu0 0.0
    %1024 = vmatpush1.msra.mxu0 0.0
    %1025 = vmatprep.subr.mxu0 0.0
    %1026 = vmatpush1.msra.mxu0 0.0
    %1027 = vmatprep.subr.mxu0 0.0
    %1028 = vmatpush1.msra.mxu0 0.0
    %1029 = vmatprep.subr.mxu0 0.0
    %1030 = vmatpush1.msra.mxu0 0.0
    %1031 = vmatprep.subr.mxu0 0.0
    %1032 = vmatpush1.msra.mxu0 0.0
    %1033 = vmatprep.subr.mxu0 0.0
    %1034 = vmatpush1.msra.mxu0 0.0
    %1035 = vmatprep.subr.mxu0 0.0
    %1036 = vmatpush1.msra.mxu0 0.0
    %1037 = vmatprep.subr.mxu0 0.0
    %1038 = vmatpush1.msra.mxu0 0.0
    %1039 = vmatprep.subr.mxu0 0.0
    %1040 = vmatpush1.msra.mxu0 0.0
    %1041 = vmatprep.subr.mxu0 0.0
    %1042 = vmatpush1.msra.mxu0 0.0
    %1043 = vmatprep.subr.mxu0 0.0
    %1044 = vmatpush1.msra.mxu0 0.0
    %1045 = vmatprep.subr.mxu0 0.0
    %1046 = vmatpush1.msra.mxu0 0.0
    %1047 = vmatprep.subr.mxu0 0.0
    %1048 = vmatpush1.msra.mxu0 0.0
    %1049 = vmatprep.subr.mxu0 0.0
    %1050 = vmatpush1.msra.mxu0 0.0
    %1051 = vmatprep.mubr.f32.mxu0 0.0
    %v1052 = vand.u32 %v166, 4294901760
    %v1053 = vsub.f32 %v166, %v1052
    %v1054 = vand.u32 %v1053, 4294901760
    %v1055 = vsub.f32 %v1053, %v1054
    %v1056 = vand.u32 %v1055, 4294901760
    %1057 = vmatmul.mubr.f32.gmra.mrb[0].mxu0 %v1056
    %v1058 = vpop.f32.mrb[0].mxu0
    %v1059 = vadd.f32 0.0, %v1058
    %v1060 = vpop.f32.mrb[0].mxu0
    %v1061 = vadd.f32 0.0, %v1060
    %1062 = vmatprep.mubr.f32.mxu0 0.0
    %v1063 = vand.u32 %v169, 4294901760
    %v1064 = vsub.f32 %v169, %v1063
    %v1065 = vand.u32 %v1064, 4294901760
    %v1066 = vsub.f32 %v1064, %v1065
    %v1067 = vand.u32 %v1066, 4294901760
    %1068 = vmatmul.mubr.f32.gmra.mrb[0].mxu0 %v1067
    %v1069 = vpop.f32.mrb[0].mxu0
    %v1070 = vadd.f32 0.0, %v1069
    %v1071 = vpop.f32.mrb[0].mxu0
    %v1072 = vadd.f32 0.0, %v1071
    %1073 = vmatprep.mubr.f32.mxu0 0.0
    %v1074 = vand.u32 %v172, 4294901760
    %v1075 = vsub.f32 %v172, %v1074
    %v1076 = vand.u32 %v1075, 4294901760
    %v1077 = vsub.f32 %v1075, %v1076
    %v1078 = vand.u32 %v1077, 4294901760
    %1079 = vmatmul.mubr.f32.gmra.mrb[0].mxu0 %v1078
    %v1080 = vpop.f32.mrb[0].mxu0
    %v1081 = vadd.f32 0.0, %v1080
    %v1082 = vpop.f32.mrb[0].mxu0
    %v1083 = vadd.f32 0.0, %v1082
    %1084 = vmatprep.mubr.f32.mxu0 0.0
    %v1085 = vand.u32 %v175, 4294901760
    %v1086 = vsub.f32 %v175, %v1085
    %v1087 = vand.u32 %v1086, 4294901760
    %v1088 = vsub.f32 %v1086, %v1087
    %v1089 = vand.u32 %v1088, 4294901760
    %1090 = vmatmul.mubr.f32.gmra.mrb[0].mxu0 %v1089
    %v1091 = vpop.f32.mrb[0].mxu0
    %v1092 = vadd.f32 0.0, %v1091
    %v1093 = vpop.f32.mrb[0].mxu0
    %v1094 = vadd.f32 0.0, %v1093
    %1095 = vdwg.mxu0
    %v1096 = vand.u32 %v135, 4294901760
    %v1097 = vsub.f32 %v135, %v1096
    %v1098 = vand.u32 %v1097, 4294901760
    %v1099 = vsub.f32 %v1097, %v1098
    %v1100 = vand.u32 %v1099, 4294901760
    %1101 = vmatprep.subr.mxu0 %v1100
    %v1102 = vand.u32 %v134, 4294901760
    %v1103 = vsub.f32 %v134, %v1102
    %v1104 = vand.u32 %v1103, 4294901760
    %v1105 = vsub.f32 %v1103, %v1104
    %v1106 = vand.u32 %v1105, 4294901760
    %1107 = vmatpush1.msra.mxu0 %v1106
    %v1108 = vand.u32 %v139, 4294901760
    %v1109 = vsub.f32 %v139, %v1108
    %v1110 = vand.u32 %v1109, 4294901760
    %v1111 = vsub.f32 %v1109, %v1110
    %v1112 = vand.u32 %v1111, 4294901760
    %1113 = vmatprep.subr.mxu0 %v1112
    %v1114 = vand.u32 %v138, 4294901760
    %v1115 = vsub.f32 %v138, %v1114
    %v1116 = vand.u32 %v1115, 4294901760
    %v1117 = vsub.f32 %v1115, %v1116
    %v1118 = vand.u32 %v1117, 4294901760
    %1119 = vmatpush1.msra.mxu0 %v1118
    %v1120 = vand.u32 %v143, 4294901760
    %v1121 = vsub.f32 %v143, %v1120
    %v1122 = vand.u32 %v1121, 4294901760
    %v1123 = vsub.f32 %v1121, %v1122
    %v1124 = vand.u32 %v1123, 4294901760
    %1125 = vmatprep.subr.mxu0 %v1124
    %v1126 = vand.u32 %v142, 4294901760
    %v1127 = vsub.f32 %v142, %v1126
    %v1128 = vand.u32 %v1127, 4294901760
    %v1129 = vsub.f32 %v1127, %v1128
    %v1130 = vand.u32 %v1129, 4294901760
    %1131 = vmatpush1.msra.mxu0 %v1130
    %v1132 = vand.u32 %v147, 4294901760
    %v1133 = vsub.f32 %v147, %v1132
    %v1134 = vand.u32 %v1133, 4294901760
    %v1135 = vsub.f32 %v1133, %v1134
    %v1136 = vand.u32 %v1135, 4294901760
    %1137 = vmatprep.subr.mxu0 %v1136
    %v1138 = vand.u32 %v146, 4294901760
    %v1139 = vsub.f32 %v146, %v1138
    %v1140 = vand.u32 %v1139, 4294901760
    %v1141 = vsub.f32 %v1139, %v1140
    %v1142 = vand.u32 %v1141, 4294901760
    %1143 = vmatpush1.msra.mxu0 %v1142
    %v1144 = vand.u32 %v151, 4294901760
    %v1145 = vsub.f32 %v151, %v1144
    %v1146 = vand.u32 %v1145, 4294901760
    %v1147 = vsub.f32 %v1145, %v1146
    %v1148 = vand.u32 %v1147, 4294901760
    %1149 = vmatprep.subr.mxu0 %v1148
    %v1150 = vand.u32 %v150, 4294901760
    %v1151 = vsub.f32 %v150, %v1150
    %v1152 = vand.u32 %v1151, 4294901760
    %v1153 = vsub.f32 %v1151, %v1152
    %v1154 = vand.u32 %v1153, 4294901760
    %1155 = vmatpush1.msra.mxu0 %v1154
    %v1156 = vand.u32 %v155, 4294901760
    %v1157 = vsub.f32 %v155, %v1156
    %v1158 = vand.u32 %v1157, 4294901760
    %v1159 = vsub.f32 %v1157, %v1158
    %v1160 = vand.u32 %v1159, 4294901760
    %1161 = vmatprep.subr.mxu0 %v1160
    %v1162 = vand.u32 %v154, 4294901760
    %v1163 = vsub.f32 %v154, %v1162
    %v1164 = vand.u32 %v1163, 4294901760
    %v1165 = vsub.f32 %v1163, %v1164
    %v1166 = vand.u32 %v1165, 4294901760
    %1167 = vmatpush1.msra.mxu0 %v1166
    %v1168 = vand.u32 %v159, 4294901760
    %v1169 = vsub.f32 %v159, %v1168
    %v1170 = vand.u32 %v1169, 4294901760
    %v1171 = vsub.f32 %v1169, %v1170
    %v1172 = vand.u32 %v1171, 4294901760
    %1173 = vmatprep.subr.mxu0 %v1172
    %v1174 = vand.u32 %v158, 4294901760
    %v1175 = vsub.f32 %v158, %v1174
    %v1176 = vand.u32 %v1175, 4294901760
    %v1177 = vsub.f32 %v1175, %v1176
    %v1178 = vand.u32 %v1177, 4294901760
    %1179 = vmatpush1.msra.mxu0 %v1178
    %v1180 = vand.u32 %v163, 4294901760
    %v1181 = vsub.f32 %v163, %v1180
    %v1182 = vand.u32 %v1181, 4294901760
    %v1183 = vsub.f32 %v1181, %v1182
    %v1184 = vand.u32 %v1183, 4294901760
    %1185 = vmatprep.subr.mxu0 %v1184
    %v1186 = vand.u32 %v162, 4294901760
    %v1187 = vsub.f32 %v162, %v1186
    %v1188 = vand.u32 %v1187, 4294901760
    %v1189 = vsub.f32 %v1187, %v1188
    %v1190 = vand.u32 %v1189, 4294901760
    %1191 = vmatpush1.msra.mxu0 %v1190
    %1192 = vmatprep.subr.mxu0 0.0
    %1193 = vmatpush1.msra.mxu0 0.0
    %1194 = vmatprep.subr.mxu0 0.0
    %1195 = vmatpush1.msra.mxu0 0.0
    %1196 = vmatprep.subr.mxu0 0.0
    %1197 = vmatpush1.msra.mxu0 0.0
    %1198 = vmatprep.subr.mxu0 0.0
    %1199 = vmatpush1.msra.mxu0 0.0
    %1200 = vmatprep.subr.mxu0 0.0
    %1201 = vmatpush1.msra.mxu0 0.0
    %1202 = vmatprep.subr.mxu0 0.0
    %1203 = vmatpush1.msra.mxu0 0.0
    %1204 = vmatprep.subr.mxu0 0.0
    %1205 = vmatpush1.msra.mxu0 0.0
    %1206 = vmatprep.subr.mxu0 0.0
    %1207 = vmatpush1.msra.mxu0 0.0
    %1208 = vmatprep.subr.mxu0 0.0
    %1209 = vmatpush1.msra.mxu0 0.0
    %1210 = vmatprep.subr.mxu0 0.0
    %1211 = vmatpush1.msra.mxu0 0.0
    %1212 = vmatprep.subr.mxu0 0.0
    %1213 = vmatpush1.msra.mxu0 0.0
    %1214 = vmatprep.subr.mxu0 0.0
    %1215 = vmatpush1.msra.mxu0 0.0
    %1216 = vmatprep.subr.mxu0 0.0
    %1217 = vmatpush1.msra.mxu0 0.0
    %1218 = vmatprep.subr.mxu0 0.0
    %1219 = vmatpush1.msra.mxu0 0.0
    %1220 = vmatprep.subr.mxu0 0.0
    %1221 = vmatpush1.msra.mxu0 0.0
    %1222 = vmatprep.subr.mxu0 0.0
    %1223 = vmatpush1.msra.mxu0 0.0
    %1224 = vmatprep.subr.mxu0 0.0
    %1225 = vmatpush1.msra.mxu0 0.0
    %1226 = vmatprep.subr.mxu0 0.0
    %1227 = vmatpush1.msra.mxu0 0.0
    %1228 = vmatprep.subr.mxu0 0.0
    %1229 = vmatpush1.msra.mxu0 0.0
    %1230 = vmatprep.subr.mxu0 0.0
    %1231 = vmatpush1.msra.mxu0 0.0
    %1232 = vmatprep.subr.mxu0 0.0
    %1233 = vmatpush1.msra.mxu0 0.0
    %1234 = vmatprep.subr.mxu0 0.0
    %1235 = vmatpush1.msra.mxu0 0.0
    %1236 = vmatprep.subr.mxu0 0.0
    %1237 = vmatpush1.msra.mxu0 0.0
    %1238 = vmatprep.subr.mxu0 0.0
    %1239 = vmatpush1.msra.mxu0 0.0
    %1240 = vmatprep.mubr.f32.mxu0 0.0
    %v1241 = vand.u32 %v166, 4294901760
    %1242 = vmatmul.mubr.f32.gmra.mrb[0].mxu0 %v1241
    %v1243 = vpop.f32.mrb[0].mxu0
    %v1244 = vadd.f32 %v1059, %v1243
    %v1245 = vpop.f32.mrb[0].mxu0
    %v1246 = vadd.f32 %v1061, %v1245
    %1247 = vmatprep.mubr.f32.mxu0 0.0
    %v1248 = vand.u32 %v169, 4294901760
    %1249 = vmatmul.mubr.f32.gmra.mrb[0].mxu0 %v1248
    %v1250 = vpop.f32.mrb[0].mxu0
    %v1251 = vadd.f32 %v1070, %v1250
    %v1252 = vpop.f32.mrb[0].mxu0
    %v1253 = vadd.f32 %v1072, %v1252
    %1254 = vmatprep.mubr.f32.mxu0 0.0
    %v1255 = vand.u32 %v172, 4294901760
    %1256 = vmatmul.mubr.f32.gmra.mrb[0].mxu0 %v1255
    %v1257 = vpop.f32.mrb[0].mxu0
    %v1258 = vadd.f32 %v1081, %v1257
    %v1259 = vpop.f32.mrb[0].mxu0
    %v1260 = vadd.f32 %v1083, %v1259
    %1261 = vmatprep.mubr.f32.mxu0 0.0
    %v1262 = vand.u32 %v175, 4294901760
    %1263 = vmatmul.mubr.f32.gmra.mrb[0].mxu0 %v1262
    %v1264 = vpop.f32.mrb[0].mxu0
    %v1265 = vadd.f32 %v1092, %v1264
    %v1266 = vpop.f32.mrb[0].mxu0
    %v1267 = vadd.f32 %v1094, %v1266
    %1268 = vdwg.mxu0
    %v1269 = vand.u32 %v135, 4294901760
    %v1270 = vsub.f32 %v135, %v1269
    %1271 = vmatprep.subr.mxu0 %v1270
    %v1272 = vand.u32 %v134, 4294901760
    %v1273 = vsub.f32 %v134, %v1272
    %1274 = vmatpush1.msra.mxu0 %v1273
    %v1275 = vand.u32 %v139, 4294901760
    %v1276 = vsub.f32 %v139, %v1275
    %1277 = vmatprep.subr.mxu0 %v1276
    %v1278 = vand.u32 %v138, 4294901760
    %v1279 = vsub.f32 %v138, %v1278
    %1280 = vmatpush1.msra.mxu0 %v1279
    %v1281 = vand.u32 %v143, 4294901760
    %v1282 = vsub.f32 %v143, %v1281
    %1283 = vmatprep.subr.mxu0 %v1282
    %v1284 = vand.u32 %v142, 4294901760
    %v1285 = vsub.f32 %v142, %v1284
    %1286 = vmatpush1.msra.mxu0 %v1285
    %v1287 = vand.u32 %v147, 4294901760
    %v1288 = vsub.f32 %v147, %v1287
    %1289 = vmatprep.subr.mxu0 %v1288
    %v1290 = vand.u32 %v146, 4294901760
    %v1291 = vsub.f32 %v146, %v1290
    %1292 = vmatpush1.msra.mxu0 %v1291
    %v1293 = vand.u32 %v151, 4294901760
    %v1294 = vsub.f32 %v151, %v1293
    %1295 = vmatprep.subr.mxu0 %v1294
    %v1296 = vand.u32 %v150, 4294901760
    %v1297 = vsub.f32 %v150, %v1296
    %1298 = vmatpush1.msra.mxu0 %v1297
    %v1299 = vand.u32 %v155, 4294901760
    %v1300 = vsub.f32 %v155, %v1299
    %1301 = vmatprep.subr.mxu0 %v1300
    %v1302 = vand.u32 %v154, 4294901760
    %v1303 = vsub.f32 %v154, %v1302
    %1304 = vmatpush1.msra.mxu0 %v1303
    %v1305 = vand.u32 %v159, 4294901760
    %v1306 = vsub.f32 %v159, %v1305
    %1307 = vmatprep.subr.mxu0 %v1306
    %v1308 = vand.u32 %v158, 4294901760
    %v1309 = vsub.f32 %v158, %v1308
    %1310 = vmatpush1.msra.mxu0 %v1309
    %v1311 = vand.u32 %v163, 4294901760
    %v1312 = vsub.f32 %v163, %v1311
    %1313 = vmatprep.subr.mxu0 %v1312
    %v1314 = vand.u32 %v162, 4294901760
    %v1315 = vsub.f32 %v162, %v1314
    %1316 = vmatpush1.msra.mxu0 %v1315
    %1317 = vmatprep.subr.mxu0 0.0
    %1318 = vmatpush1.msra.mxu0 0.0
    %1319 = vmatprep.subr.mxu0 0.0
    %1320 = vmatpush1.msra.mxu0 0.0
    %1321 = vmatprep.subr.mxu0 0.0
    %1322 = vmatpush1.msra.mxu0 0.0
    %1323 = vmatprep.subr.mxu0 0.0
    %1324 = vmatpush1.msra.mxu0 0.0
    %1325 = vmatprep.subr.mxu0 0.0
    %1326 = vmatpush1.msra.mxu0 0.0
    %1327 = vmatprep.subr.mxu0 0.0
    %1328 = vmatpush1.msra.mxu0 0.0
    %1329 = vmatprep.subr.mxu0 0.0
    %1330 = vmatpush1.msra.mxu0 0.0
    %1331 = vmatprep.subr.mxu0 0.0
    %1332 = vmatpush1.msra.mxu0 0.0
    %1333 = vmatprep.subr.mxu0 0.0
    %1334 = vmatpush1.msra.mxu0 0.0
    %1335 = vmatprep.subr.mxu0 0.0
    %1336 = vmatpush1.msra.mxu0 0.0
    %1337 = vmatprep.subr.mxu0 0.0
    %1338 = vmatpush1.msra.mxu0 0.0
    %1339 = vmatprep.subr.mxu0 0.0
    %1340 = vmatpush1.msra.mxu0 0.0
    %1341 = vmatprep.subr.mxu0 0.0
    %1342 = vmatpush1.msra.mxu0 0.0
    %1343 = vmatprep.subr.mxu0 0.0
    %1344 = vmatpush1.msra.mxu0 0.0
    %1345 = vmatprep.subr.mxu0 0.0
    %1346 = vmatpush1.msra.mxu0 0.0
    %1347 = vmatprep.subr.mxu0 0.0
    %1348 = vmatpush1.msra.mxu0 0.0
    %1349 = vmatprep.subr.mxu0 0.0
    %1350 = vmatpush1.msra.mxu0 0.0
    %1351 = vmatprep.subr.mxu0 0.0
    %1352 = vmatpush1.msra.mxu0 0.0
    %1353 = vmatprep.subr.mxu0 0.0
    %1354 = vmatpush1.msra.mxu0 0.0
    %1355 = vmatprep.subr.mxu0 0.0
    %1356 = vmatpush1.msra.mxu0 0.0
    %1357 = vmatprep.subr.mxu0 0.0
    %1358 = vmatpush1.msra.mxu0 0.0
    %1359 = vmatprep.subr.mxu0 0.0
    %1360 = vmatpush1.msra.mxu0 0.0
    %1361 = vmatprep.subr.mxu0 0.0
    %1362 = vmatpush1.msra.mxu0 0.0
    %1363 = vmatprep.subr.mxu0 0.0
    %1364 = vmatpush1.msra.mxu0 0.0
    %1365 = vmatprep.mubr.f32.mxu0 0.0
    %v1366 = vand.u32 %v166, 4294901760
    %v1367 = vsub.f32 %v166, %v1366
    %1368 = vmatmul.mubr.f32.gmra.mrb[0].mxu0 %v1367
    %v1369 = vpop.f32.mrb[0].mxu0
    %v1370 = vadd.f32 %v1244, %v1369
    %v1371 = vpop.f32.mrb[0].mxu0
    %v1372 = vadd.f32 %v1246, %v1371
    %1373 = vmatprep.mubr.f32.mxu0 0.0
    %v1374 = vand.u32 %v169, 4294901760
    %v1375 = vsub.f32 %v169, %v1374
    %1376 = vmatmul.mubr.f32.gmra.mrb[0].mxu0 %v1375
    %v1377 = vpop.f32.mrb[0].mxu0
    %v1378 = vadd.f32 %v1251, %v1377
    %v1379 = vpop.f32.mrb[0].mxu0
    %v1380 = vadd.f32 %v1253, %v1379
    %1381 = vmatprep.mubr.f32.mxu0 0.0
    %v1382 = vand.u32 %v172, 4294901760
    %v1383 = vsub.f32 %v172, %v1382
    %1384 = vmatmul.mubr.f32.gmra.mrb[0].mxu0 %v1383
    %v1385 = vpop.f32.mrb[0].mxu0
    %v1386 = vadd.f32 %v1258, %v1385
    %v1387 = vpop.f32.mrb[0].mxu0
    %v1388 = vadd.f32 %v1260, %v1387
    %1389 = vmatprep.mubr.f32.mxu0 0.0
    %v1390 = vand.u32 %v175, 4294901760
    %v1391 = vsub.f32 %v175, %v1390
    %1392 = vmatmul.mubr.f32.gmra.mrb[0].mxu0 %v1391
    %v1393 = vpop.f32.mrb[0].mxu0
    %v1394 = vadd.f32 %v1265, %v1393
    %v1395 = vpop.f32.mrb[0].mxu0
    %v1396 = vadd.f32 %v1267, %v1395
    %1397 = vdwg.mxu0
    %v1398 = vand.u32 %v135, 4294901760
    %1399 = vmatprep.subr.mxu0 %v1398
    %v1400 = vand.u32 %v134, 4294901760
    %1401 = vmatpush1.msra.mxu0 %v1400
    %v1402 = vand.u32 %v139, 4294901760
    %1403 = vmatprep.subr.mxu0 %v1402
    %v1404 = vand.u32 %v138, 4294901760
    %1405 = vmatpush1.msra.mxu0 %v1404
    %v1406 = vand.u32 %v143, 4294901760
    %1407 = vmatprep.subr.mxu0 %v1406
    %v1408 = vand.u32 %v142, 4294901760
    %1409 = vmatpush1.msra.mxu0 %v1408
    %v1410 = vand.u32 %v147, 4294901760
    %1411 = vmatprep.subr.mxu0 %v1410
    %v1412 = vand.u32 %v146, 4294901760
    %1413 = vmatpush1.msra.mxu0 %v1412
    %v1414 = vand.u32 %v151, 4294901760
    %1415 = vmatprep.subr.mxu0 %v1414
    %v1416 = vand.u32 %v150, 4294901760
    %1417 = vmatpush1.msra.mxu0 %v1416
    %v1418 = vand.u32 %v155, 4294901760
    %1419 = vmatprep.subr.mxu0 %v1418
    %v1420 = vand.u32 %v154, 4294901760
    %1421 = vmatpush1.msra.mxu0 %v1420
    %v1422 = vand.u32 %v159, 4294901760
    %1423 = vmatprep.subr.mxu0 %v1422
    %v1424 = vand.u32 %v158, 4294901760
    %1425 = vmatpush1.msra.mxu0 %v1424
    %v1426 = vand.u32 %v163, 4294901760
    %1427 = vmatprep.subr.mxu0 %v1426
    %v1428 = vand.u32 %v162, 4294901760
    %1429 = vmatpush1.msra.mxu0 %v1428
    %1430 = vmatprep.subr.mxu0 0.0
    %1431 = vmatpush1.msra.mxu0 0.0
    %1432 = vmatprep.subr.mxu0 0.0
    %1433 = vmatpush1.msra.mxu0 0.0
    %1434 = vmatprep.subr.mxu0 0.0
    %1435 = vmatpush1.msra.mxu0 0.0
    %1436 = vmatprep.subr.mxu0 0.0
    %1437 = vmatpush1.msra.mxu0 0.0
    %1438 = vmatprep.subr.mxu0 0.0
    %1439 = vmatpush1.msra.mxu0 0.0
    %1440 = vmatprep.subr.mxu0 0.0
    %1441 = vmatpush1.msra.mxu0 0.0
    %1442 = vmatprep.subr.mxu0 0.0
    %1443 = vmatpush1.msra.mxu0 0.0
    %1444 = vmatprep.subr.mxu0 0.0
    %1445 = vmatpush1.msra.mxu0 0.0
    %1446 = vmatprep.subr.mxu0 0.0
    %1447 = vmatpush1.msra.mxu0 0.0
    %1448 = vmatprep.subr.mxu0 0.0
    %1449 = vmatpush1.msra.mxu0 0.0
    %1450 = vmatprep.subr.mxu0 0.0
    %1451 = vmatpush1.msra.mxu0 0.0
    %1452 = vmatprep.subr.mxu0 0.0
    %1453 = vmatpush1.msra.mxu0 0.0
    %1454 = vmatprep.subr.mxu0 0.0
    %1455 = vmatpush1.msra.mxu0 0.0
    %1456 = vmatprep.subr.mxu0 0.0
    %1457 = vmatpush1.msra.mxu0 0.0
    %1458 = vmatprep.subr.mxu0 0.0
    %1459 = vmatpush1.msra.mxu0 0.0
    %1460 = vmatprep.subr.mxu0 0.0
    %1461 = vmatpush1.msra.mxu0 0.0
    %1462 = vmatprep.subr.mxu0 0.0
    %1463 = vmatpush1.msra.mxu0 0.0
    %1464 = vmatprep.subr.mxu0 0.0
    %1465 = vmatpush1.msra.mxu0 0.0
    %1466 = vmatprep.subr.mxu0 0.0
    %1467 = vmatpush1.msra.mxu0 0.0
    %1468 = vmatprep.subr.mxu0 0.0
    %1469 = vmatpush1.msra.mxu0 0.0
    %1470 = vmatprep.subr.mxu0 0.0
    %1471 = vmatpush1.msra.mxu0 0.0
    %1472 = vmatprep.subr.mxu0 0.0
    %1473 = vmatpush1.msra.mxu0 0.0
    %1474 = vmatprep.subr.mxu0 0.0
    %1475 = vmatpush1.msra.mxu0 0.0
    %1476 = vmatprep.subr.mxu0 0.0
    %1477 = vmatpush1.msra.mxu0 0.0
    %1478 = vmatprep.mubr.f32.mxu0 0.0
    %v1479 = vand.u32 %v166, 4294901760
    %v1480 = vsub.f32 %v166, %v1479
    %v1481 = vand.u32 %v1480, 4294901760
    %1482 = vmatmul.mubr.f32.gmra.mrb[0].mxu0 %v1481
    %v1483 = vpop.f32.mrb[0].mxu0
    %v1484 = vadd.f32 %v1370, %v1483
    %v1485 = vpop.f32.mrb[0].mxu0
    %v1486 = vadd.f32 %v1372, %v1485
    %1487 = vmatprep.mubr.f32.mxu0 0.0
    %v1488 = vand.u32 %v169, 4294901760
    %v1489 = vsub.f32 %v169, %v1488
    %v1490 = vand.u32 %v1489, 4294901760
    %1491 = vmatmul.mubr.f32.gmra.mrb[0].mxu0 %v1490
    %v1492 = vpop.f32.mrb[0].mxu0
    %v1493 = vadd.f32 %v1378, %v1492
    %v1494 = vpop.f32.mrb[0].mxu0
    %v1495 = vadd.f32 %v1380, %v1494
    %1496 = vmatprep.mubr.f32.mxu0 0.0
    %v1497 = vand.u32 %v172, 4294901760
    %v1498 = vsub.f32 %v172, %v1497
    %v1499 = vand.u32 %v1498, 4294901760
    %1500 = vmatmul.mubr.f32.gmra.mrb[0].mxu0 %v1499
    %v1501 = vpop.f32.mrb[0].mxu0
    %v1502 = vadd.f32 %v1386, %v1501
    %v1503 = vpop.f32.mrb[0].mxu0
    %v1504 = vadd.f32 %v1388, %v1503
    %1505 = vmatprep.mubr.f32.mxu0 0.0
    %v1506 = vand.u32 %v175, 4294901760
    %v1507 = vsub.f32 %v175, %v1506
    %v1508 = vand.u32 %v1507, 4294901760
    %1509 = vmatmul.mubr.f32.gmra.mrb[0].mxu0 %v1508
    %v1510 = vpop.f32.mrb[0].mxu0
    %v1511 = vadd.f32 %v1394, %v1510
    %v1512 = vpop.f32.mrb[0].mxu0
    %v1513 = vadd.f32 %v1396, %v1512
    %1514 = vdwg.mxu0
    %v1515 = vand.u32 %v135, 4294901760
    %v1516 = vsub.f32 %v135, %v1515
    %v1517 = vand.u32 %v1516, 4294901760
    %1518 = vmatprep.subr.mxu0 %v1517
    %v1519 = vand.u32 %v134, 4294901760
    %v1520 = vsub.f32 %v134, %v1519
    %v1521 = vand.u32 %v1520, 4294901760
    %1522 = vmatpush1.msra.mxu0 %v1521
    %v1523 = vand.u32 %v139, 4294901760
    %v1524 = vsub.f32 %v139, %v1523
    %v1525 = vand.u32 %v1524, 4294901760
    %1526 = vmatprep.subr.mxu0 %v1525
    %v1527 = vand.u32 %v138, 4294901760
    %v1528 = vsub.f32 %v138, %v1527
    %v1529 = vand.u32 %v1528, 4294901760
    %1530 = vmatpush1.msra.mxu0 %v1529
    %v1531 = vand.u32 %v143, 4294901760
    %v1532 = vsub.f32 %v143, %v1531
    %v1533 = vand.u32 %v1532, 4294901760
    %1534 = vmatprep.subr.mxu0 %v1533
    %v1535 = vand.u32 %v142, 4294901760
    %v1536 = vsub.f32 %v142, %v1535
    %v1537 = vand.u32 %v1536, 4294901760
    %1538 = vmatpush1.msra.mxu0 %v1537
    %v1539 = vand.u32 %v147, 4294901760
    %v1540 = vsub.f32 %v147, %v1539
    %v1541 = vand.u32 %v1540, 4294901760
    %1542 = vmatprep.subr.mxu0 %v1541
    %v1543 = vand.u32 %v146, 4294901760
    %v1544 = vsub.f32 %v146, %v1543
    %v1545 = vand.u32 %v1544, 4294901760
    %1546 = vmatpush1.msra.mxu0 %v1545
    %v1547 = vand.u32 %v151, 4294901760
    %v1548 = vsub.f32 %v151, %v1547
    %v1549 = vand.u32 %v1548, 4294901760
    %1550 = vmatprep.subr.mxu0 %v1549
    %v1551 = vand.u32 %v150, 4294901760
    %v1552 = vsub.f32 %v150, %v1551
    %v1553 = vand.u32 %v1552, 4294901760
    %1554 = vmatpush1.msra.mxu0 %v1553
    %v1555 = vand.u32 %v155, 4294901760
    %v1556 = vsub.f32 %v155, %v1555
    %v1557 = vand.u32 %v1556, 4294901760
    %1558 = vmatprep.subr.mxu0 %v1557
    %v1559 = vand.u32 %v154, 4294901760
    %v1560 = vsub.f32 %v154, %v1559
    %v1561 = vand.u32 %v1560, 4294901760
    %1562 = vmatpush1.msra.mxu0 %v1561
    %v1563 = vand.u32 %v159, 4294901760
    %v1564 = vsub.f32 %v159, %v1563
    %v1565 = vand.u32 %v1564, 4294901760
    %1566 = vmatprep.subr.mxu0 %v1565
    %v1567 = vand.u32 %v158, 4294901760
    %v1568 = vsub.f32 %v158, %v1567
    %v1569 = vand.u32 %v1568, 4294901760
    %1570 = vmatpush1.msra.mxu0 %v1569
    %v1571 = vand.u32 %v163, 4294901760
    %v1572 = vsub.f32 %v163, %v1571
    %v1573 = vand.u32 %v1572, 4294901760
    %1574 = vmatprep.subr.mxu0 %v1573
    %v1575 = vand.u32 %v162, 4294901760
    %v1576 = vsub.f32 %v162, %v1575
    %v1577 = vand.u32 %v1576, 4294901760
    %1578 = vmatpush1.msra.mxu0 %v1577
    %1579 = vmatprep.subr.mxu0 0.0
    %1580 = vmatpush1.msra.mxu0 0.0
    %1581 = vmatprep.subr.mxu0 0.0
    %1582 = vmatpush1.msra.mxu0 0.0
    %1583 = vmatprep.subr.mxu0 0.0
    %1584 = vmatpush1.msra.mxu0 0.0
    %1585 = vmatprep.subr.mxu0 0.0
    %1586 = vmatpush1.msra.mxu0 0.0
    %1587 = vmatprep.subr.mxu0 0.0
    %1588 = vmatpush1.msra.mxu0 0.0
    %1589 = vmatprep.subr.mxu0 0.0
    %1590 = vmatpush1.msra.mxu0 0.0
    %1591 = vmatprep.subr.mxu0 0.0
    %1592 = vmatpush1.msra.mxu0 0.0
    %1593 = vmatprep.subr.mxu0 0.0
    %1594 = vmatpush1.msra.mxu0 0.0
    %1595 = vmatprep.subr.mxu0 0.0
    %1596 = vmatpush1.msra.mxu0 0.0
    %1597 = vmatprep.subr.mxu0 0.0
    %1598 = vmatpush1.msra.mxu0 0.0
    %1599 = vmatprep.subr.mxu0 0.0
    %1600 = vmatpush1.msra.mxu0 0.0
    %1601 = vmatprep.subr.mxu0 0.0
    %1602 = vmatpush1.msra.mxu0 0.0
    %1603 = vmatprep.subr.mxu0 0.0
    %1604 = vmatpush1.msra.mxu0 0.0
    %1605 = vmatprep.subr.mxu0 0.0
    %1606 = vmatpush1.msra.mxu0 0.0
    %1607 = vmatprep.subr.mxu0 0.0
    %1608 = vmatpush1.msra.mxu0 0.0
    %1609 = vmatprep.subr.mxu0 0.0
    %1610 = vmatpush1.msra.mxu0 0.0
    %1611 = vmatprep.subr.mxu0 0.0
    %1612 = vmatpush1.msra.mxu0 0.0
    %1613 = vmatprep.subr.mxu0 0.0
    %1614 = vmatpush1.msra.mxu0 0.0
    %1615 = vmatprep.subr.mxu0 0.0
    %1616 = vmatpush1.msra.mxu0 0.0
    %1617 = vmatprep.subr.mxu0 0.0
    %1618 = vmatpush1.msra.mxu0 0.0
    %1619 = vmatprep.subr.mxu0 0.0
    %1620 = vmatpush1.msra.mxu0 0.0
    %1621 = vmatprep.subr.mxu0 0.0
    %1622 = vmatpush1.msra.mxu0 0.0
    %1623 = vmatprep.subr.mxu0 0.0
    %1624 = vmatpush1.msra.mxu0 0.0
    %1625 = vmatprep.subr.mxu0 0.0
    %1626 = vmatpush1.msra.mxu0 0.0
    %1627 = vmatprep.mubr.f32.mxu0 0.0
    %v1628 = vand.u32 %v166, 4294901760
    %1629 = vmatmul.mubr.f32.gmra.mrb[0].mxu0 %v1628
    %v1630 = vpop.f32.mrb[0].mxu0
    %v1631 = vadd.f32 %v1484, %v1630
    %v1632 = vpop.f32.mrb[0].mxu0
    %v1633 = vadd.f32 %v1486, %v1632
    %1634 = vmatprep.mubr.f32.mxu0 0.0
    %v1635 = vand.u32 %v169, 4294901760
    %1636 = vmatmul.mubr.f32.gmra.mrb[0].mxu0 %v1635
    %v1637 = vpop.f32.mrb[0].mxu0
    %v1638 = vadd.f32 %v1493, %v1637
    %v1639 = vpop.f32.mrb[0].mxu0
    %v1640 = vadd.f32 %v1495, %v1639
    %1641 = vmatprep.mubr.f32.mxu0 0.0
    %v1642 = vand.u32 %v172, 4294901760
    %1643 = vmatmul.mubr.f32.gmra.mrb[0].mxu0 %v1642
    %v1644 = vpop.f32.mrb[0].mxu0
    %v1645 = vadd.f32 %v1502, %v1644
    %v1646 = vpop.f32.mrb[0].mxu0
    %v1647 = vadd.f32 %v1504, %v1646
    %1648 = vmatprep.mubr.f32.mxu0 0.0
    %v1649 = vand.u32 %v175, 4294901760
    %1650 = vmatmul.mubr.f32.gmra.mrb[0].mxu0 %v1649
    %v1651 = vpop.f32.mrb[0].mxu0
    %v1652 = vadd.f32 %v1511, %v1651
    %v1653 = vpop.f32.mrb[0].mxu0
    %v1654 = vadd.f32 %v1513, %v1653
    %1655 = vdwg.mxu0
    %v1656 = vand.u32 %v135, 4294901760
    %1657 = vmatprep.subr.mxu0 %v1656
    %v1658 = vand.u32 %v134, 4294901760
    %1659 = vmatpush1.msra.mxu0 %v1658
    %v1660 = vand.u32 %v139, 4294901760
    %1661 = vmatprep.subr.mxu0 %v1660
    %v1662 = vand.u32 %v138, 4294901760
    %1663 = vmatpush1.msra.mxu0 %v1662
    %v1664 = vand.u32 %v143, 4294901760
    %1665 = vmatprep.subr.mxu0 %v1664
    %v1666 = vand.u32 %v142, 4294901760
    %1667 = vmatpush1.msra.mxu0 %v1666
    %v1668 = vand.u32 %v147, 4294901760
    %1669 = vmatprep.subr.mxu0 %v1668
    %v1670 = vand.u32 %v146, 4294901760
    %1671 = vmatpush1.msra.mxu0 %v1670
    %v1672 = vand.u32 %v151, 4294901760
    %1673 = vmatprep.subr.mxu0 %v1672
    %v1674 = vand.u32 %v150, 4294901760
    %1675 = vmatpush1.msra.mxu0 %v1674
    %v1676 = vand.u32 %v155, 4294901760
    %1677 = vmatprep.subr.mxu0 %v1676
    %v1678 = vand.u32 %v154, 4294901760
    %1679 = vmatpush1.msra.mxu0 %v1678
    %v1680 = vand.u32 %v159, 4294901760
    %1681 = vmatprep.subr.mxu0 %v1680
    %v1682 = vand.u32 %v158, 4294901760
    %1683 = vmatpush1.msra.mxu0 %v1682
    %v1684 = vand.u32 %v163, 4294901760
    %1685 = vmatprep.subr.mxu0 %v1684
    %v1686 = vand.u32 %v162, 4294901760
    %1687 = vmatpush1.msra.mxu0 %v1686
    %1688 = vmatprep.subr.mxu0 0.0
    %1689 = vmatpush1.msra.mxu0 0.0
    %1690 = vmatprep.subr.mxu0 0.0
    %1691 = vmatpush1.msra.mxu0 0.0
    %1692 = vmatprep.subr.mxu0 0.0
    %1693 = vmatpush1.msra.mxu0 0.0
    %1694 = vmatprep.subr.mxu0 0.0
    %1695 = vmatpush1.msra.mxu0 0.0
    %1696 = vmatprep.subr.mxu0 0.0
    %1697 = vmatpush1.msra.mxu0 0.0
    %1698 = vmatprep.subr.mxu0 0.0
    %1699 = vmatpush1.msra.mxu0 0.0
    %1700 = vmatprep.subr.mxu0 0.0
    %1701 = vmatpush1.msra.mxu0 0.0
    %1702 = vmatprep.subr.mxu0 0.0
    %1703 = vmatpush1.msra.mxu0 0.0
    %1704 = vmatprep.subr.mxu0 0.0
    %1705 = vmatpush1.msra.mxu0 0.0
    %1706 = vmatprep.subr.mxu0 0.0
    %1707 = vmatpush1.msra.mxu0 0.0
    %1708 = vmatprep.subr.mxu0 0.0
    %1709 = vmatpush1.msra.mxu0 0.0
    %1710 = vmatprep.subr.mxu0 0.0
    %1711 = vmatpush1.msra.mxu0 0.0
    %1712 = vmatprep.subr.mxu0 0.0
    %1713 = vmatpush1.msra.mxu0 0.0
    %1714 = vmatprep.subr.mxu0 0.0
    %1715 = vmatpush1.msra.mxu0 0.0
    %1716 = vmatprep.subr.mxu0 0.0
    %1717 = vmatpush1.msra.mxu0 0.0
    %1718 = vmatprep.subr.mxu0 0.0
    %1719 = vmatpush1.msra.mxu0 0.0
    %1720 = vmatprep.subr.mxu0 0.0
    %1721 = vmatpush1.msra.mxu0 0.0
    %1722 = vmatprep.subr.mxu0 0.0
    %1723 = vmatpush1.msra.mxu0 0.0
    %1724 = vmatprep.subr.mxu0 0.0
    %1725 = vmatpush1.msra.mxu0 0.0
    %1726 = vmatprep.subr.mxu0 0.0
    %1727 = vmatpush1.msra.mxu0 0.0
    %1728 = vmatprep.subr.mxu0 0.0
    %1729 = vmatpush1.msra.mxu0 0.0
    %1730 = vmatprep.subr.mxu0 0.0
    %1731 = vmatpush1.msra.mxu0 0.0
    %1732 = vmatprep.subr.mxu0 0.0
    %1733 = vmatpush1.msra.mxu0 0.0
    %1734 = vmatprep.subr.mxu0 0.0
    %1735 = vmatpush1.msra.mxu0 0.0
    %1736 = vmatprep.mubr.f32.mxu0 0.0
    %v1737 = vand.u32 %v166, 4294901760
    %1738 = vmatmul.mubr.f32.gmra.mrb[0].mxu0 %v1737
    %v1739 = vpop.f32.mrb[0].mxu0
    %v1740 = vadd.f32 %v1631, %v1739
    %v1741 = vpop.f32.mrb[0].mxu0
    %v1742 = vadd.f32 %v1633, %v1741
    %1743 = vmatprep.mubr.f32.mxu0 0.0
    %v1744 = vand.u32 %v169, 4294901760
    %1745 = vmatmul.mubr.f32.gmra.mrb[0].mxu0 %v1744
    %v1746 = vpop.f32.mrb[0].mxu0
    %v1747 = vadd.f32 %v1638, %v1746
    %v1748 = vpop.f32.mrb[0].mxu0
    %v1749 = vadd.f32 %v1640, %v1748
    %1750 = vmatprep.mubr.f32.mxu0 0.0
    %v1751 = vand.u32 %v172, 4294901760
    %1752 = vmatmul.mubr.f32.gmra.mrb[0].mxu0 %v1751
    %v1753 = vpop.f32.mrb[0].mxu0
    %v1754 = vadd.f32 %v1645, %v1753
    %v1755 = vpop.f32.mrb[0].mxu0
    %v1756 = vadd.f32 %v1647, %v1755
    %1757 = vmatprep.mubr.f32.mxu0 0.0
    %v1758 = vand.u32 %v175, 4294901760
    %1759 = vmatmul.mubr.f32.gmra.mrb[0].mxu0 %v1758
    %v1760 = vpop.f32.mrb[0].mxu0
    %v1761 = vadd.f32 %v1652, %v1760
    %v1762 = vpop.f32.mrb[0].mxu0
    %v1763 = vadd.f32 %v1654, %v1762
    %1764 = vdwg.mxu0
    %1765 = vxpose.xlu0.b32.start [1/16] %v946, 128
    %1766 = vxpose.xlu0.b32.cont [2/16] %v953, 128
    %1767 = vxpose.xlu0.b32.cont [3/16] %v960, 128
    %1768 = vxpose.xlu0.b32.cont [4/16] %v967, 128
    %1769 = vxpose.xlu0.b32.cont [5/16] 0.0, 128
    %1770 = vxpose.xlu0.b32.cont [6/16] 0.0, 128
    %1771 = vxpose.xlu0.b32.cont [7/16] 0.0, 128
    %1772 = vxpose.xlu0.b32.cont [8/16] 0.0, 128
    %1773 = vxpose.xlu0.b32.cont [9/16] 0.0, 128
    %1774 = vxpose.xlu0.b32.cont [10/16] 0.0, 128
    %1775 = vxpose.xlu0.b32.cont [11/16] 0.0, 128
    %1776 = vxpose.xlu0.b32.cont [12/16] 0.0, 128
    %1777 = vxpose.xlu0.b32.cont [13/16] 0.0, 128
    %1778 = vxpose.xlu0.b32.cont [14/16] 0.0, 128
    %1779 = vxpose.xlu0.b32.cont [15/16] 0.0, 128
    %1780 = vxpose.xlu0.b32.end [16/16] 0.0, 128
    %v1781 = vpop.trf.xlu0
    %v1782 = vpop.trf.xlu0
    %v1783 = vpop.trf.xlu0
    %v1784 = vpop.trf.xlu0
    %v1785 = vpop.trf.xlu0
    %v1786 = vpop.trf.xlu0
    %v1787 = vpop.trf.xlu0
    %v1788 = vpop.trf.xlu0
    %v1789 = vpop.trf.xlu0
    %v1790 = vpop.trf.xlu0
    %v1791 = vpop.trf.xlu0
    %v1792 = vpop.trf.xlu0
    %v1793 = vpop.trf.xlu0
    %v1794 = vpop.trf.xlu0
    %v1795 = vpop.trf.xlu0
    %v1796 = vpop.trf.xlu0
    %1797 = vxpose.xlu0.b32.start [1/16] %v948, 128
    %1798 = vxpose.xlu0.b32.cont [2/16] %v955, 128
    %1799 = vxpose.xlu0.b32.cont [3/16] %v962, 128
    %1800 = vxpose.xlu0.b32.cont [4/16] %v969, 128
    %1801 = vxpose.xlu0.b32.cont [5/16] 0.0, 128
    %1802 = vxpose.xlu0.b32.cont [6/16] 0.0, 128
    %1803 = vxpose.xlu0.b32.cont [7/16] 0.0, 128
    %1804 = vxpose.xlu0.b32.cont [8/16] 0.0, 128
    %1805 = vxpose.xlu0.b32.cont [9/16] 0.0, 128
    %1806 = vxpose.xlu0.b32.cont [10/16] 0.0, 128
    %1807 = vxpose.xlu0.b32.cont [11/16] 0.0, 128
    %1808 = vxpose.xlu0.b32.cont [12/16] 0.0, 128
    %1809 = vxpose.xlu0.b32.cont [13/16] 0.0, 128
    %1810 = vxpose.xlu0.b32.cont [14/16] 0.0, 128
    %1811 = vxpose.xlu0.b32.cont [15/16] 0.0, 128
    %1812 = vxpose.xlu0.b32.end [16/16] 0.0, 128
    %v1813 = vpop.trf.xlu0
    %v1814 = vpop.trf.xlu0
    %v1815 = vpop.trf.xlu0
    %v1816 = vpop.trf.xlu0
    %v1817 = vpop.trf.xlu0
    %v1818 = vpop.trf.xlu0
    %v1819 = vpop.trf.xlu0
    %v1820 = vpop.trf.xlu0
    %v1821 = vpop.trf.xlu0
    %v1822 = vpop.trf.xlu0
    %v1823 = vpop.trf.xlu0
    %v1824 = vpop.trf.xlu0
    %v1825 = vpop.trf.xlu0
    %v1826 = vpop.trf.xlu0
    %v1827 = vpop.trf.xlu0
    %v1828 = vpop.trf.xlu0
    %1829 = vxpose.xlu0.b32.start [1/16] %v1740, 128
    %1830 = vxpose.xlu0.b32.cont [2/16] %v1747, 128
    %1831 = vxpose.xlu0.b32.cont [3/16] %v1754, 128
    %1832 = vxpose.xlu0.b32.cont [4/16] %v1761, 128
    %1833 = vxpose.xlu0.b32.cont [5/16] 0.0, 128
    %1834 = vxpose.xlu0.b32.cont [6/16] 0.0, 128
    %1835 = vxpose.xlu0.b32.cont [7/16] 0.0, 128
    %1836 = vxpose.xlu0.b32.cont [8/16] 0.0, 128
    %1837 = vxpose.xlu0.b32.cont [9/16] 0.0, 128
    %1838 = vxpose.xlu0.b32.cont [10/16] 0.0, 128
    %1839 = vxpose.xlu0.b32.cont [11/16] 0.0, 128
    %1840 = vxpose.xlu0.b32.cont [12/16] 0.0, 128
    %1841 = vxpose.xlu0.b32.cont [13/16] 0.0, 128
    %1842 = vxpose.xlu0.b32.cont [14/16] 0.0, 128
    %1843 = vxpose.xlu0.b32.cont [15/16] 0.0, 128
    %1844 = vxpose.xlu0.b32.end [16/16] 0.0, 128
    %v1845 = vpop.trf.xlu0
    %v1846 = vpop.trf.xlu0
    %v1847 = vpop.trf.xlu0
    %v1848 = vpop.trf.xlu0
    %v1849 = vpop.trf.xlu0
    %v1850 = vpop.trf.xlu0
    %v1851 = vpop.trf.xlu0
    %v1852 = vpop.trf.xlu0
    %v1853 = vpop.trf.xlu0
    %v1854 = vpop.trf.xlu0
    %v1855 = vpop.trf.xlu0
    %v1856 = vpop.trf.xlu0
    %v1857 = vpop.trf.xlu0
    %v1858 = vpop.trf.xlu0
    %v1859 = vpop.trf.xlu0
    %v1860 = vpop.trf.xlu0
    %1861 = vxpose.xlu0.b32.start [1/16] %v1742, 128
    %1862 = vxpose.xlu0.b32.cont [2/16] %v1749, 128
    %1863 = vxpose.xlu0.b32.cont [3/16] %v1756, 128
    %1864 = vxpose.xlu0.b32.cont [4/16] %v1763, 128
    %1865 = vxpose.xlu0.b32.cont [5/16] 0.0, 128
    %1866 = vxpose.xlu0.b32.cont [6/16] 0.0, 128
    %1867 = vxpose.xlu0.b32.cont [7/16] 0.0, 128
    %1868 = vxpose.xlu0.b32.cont [8/16] 0.0, 128
    %1869 = vxpose.xlu0.b32.cont [9/16] 0.0, 128
    %1870 = vxpose.xlu0.b32.cont [10/16] 0.0, 128
    %1871 = vxpose.xlu0.b32.cont [11/16] 0.0, 128
    %1872 = vxpose.xlu0.b32.cont [12/16] 0.0, 128
    %1873 = vxpose.xlu0.b32.cont [13/16] 0.0, 128
    %1874 = vxpose.xlu0.b32.cont [14/16] 0.0, 128
    %1875 = vxpose.xlu0.b32.cont [15/16] 0.0, 128
    %1876 = vxpose.xlu0.b32.end [16/16] 0.0, 128
    %v1877 = vpop.trf.xlu0
    %v1878 = vpop.trf.xlu0
    %v1879 = vpop.trf.xlu0
    %v1880 = vpop.trf.xlu0
    %v1881 = vpop.trf.xlu0
    %v1882 = vpop.trf.xlu0
    %v1883 = vpop.trf.xlu0
    %v1884 = vpop.trf.xlu0
    %v1885 = vpop.trf.xlu0
    %v1886 = vpop.trf.xlu0
    %v1887 = vpop.trf.xlu0
    %v1888 = vpop.trf.xlu0
    %v1889 = vpop.trf.xlu0
    %v1890 = vpop.trf.xlu0
    %v1891 = vpop.trf.xlu0
    %v1892 = vpop.trf.xlu0
    %vm1893 = vcmask 261120
    %1894 = vst.msk [vmem:[#allocation7] sm:$0xff] %vm1893, %v1781
    %1895 = vst.msk [vmem:[#allocation7 + $0x8] sm:$0xff] %vm1893, %v1782
    %1896 = vst.msk [vmem:[#allocation7 + $0x10] sm:$0xff] %vm1893, %v1783
    %1897 = vst.msk [vmem:[#allocation7 + $0x18] sm:$0xff] %vm1893, %v1784
    %1898 = vst.msk [vmem:[#allocation7 + $0x20] sm:$0xff] %vm1893, %v1785
    %1899 = vst.msk [vmem:[#allocation7 + $0x28] sm:$0xff] %vm1893, %v1786
    %1900 = vst.msk [vmem:[#allocation7 + $0x30] sm:$0xff] %vm1893, %v1787
    %1901 = vst.msk [vmem:[#allocation7 + $0x38] sm:$0xff] %vm1893, %v1788
    %1902 = vst.msk [vmem:[#allocation7 + $0x40] sm:$0xff] %vm1893, %v1789
    %1903 = vst.msk [vmem:[#allocation7 + $0x48] sm:$0xff] %vm1893, %v1790
    %1904 = vst.msk [vmem:[#allocation7 + $0x50] sm:$0xff] %vm1893, %v1791
    %1905 = vst.msk [vmem:[#allocation7 + $0x58] sm:$0xff] %vm1893, %v1792
    %1906 = vst.msk [vmem:[#allocation7 + $0x60] sm:$0xff] %vm1893, %v1793
    %1907 = vst.msk [vmem:[#allocation7 + $0x68] sm:$0xff] %vm1893, %v1794
    %1908 = vst.msk [vmem:[#allocation7 + $0x70] sm:$0xff] %vm1893, %v1795
    %1909 = vst.msk [vmem:[#allocation7 + $0x78] sm:$0xff] %vm1893, %v1796
    %1910 = vst.msk [vmem:[#allocation7 + $0x80] sm:$0xff] %vm1893, %v1813
    %1911 = vst.msk [vmem:[#allocation7 + $0x88] sm:$0xff] %vm1893, %v1814
    %1912 = vst.msk [vmem:[#allocation7 + $0x90] sm:$0xff] %vm1893, %v1815
    %1913 = vst.msk [vmem:[#allocation7 + $0x98] sm:$0xff] %vm1893, %v1816
    %1914 = vst.msk [vmem:[#allocation7 + $0xa0] sm:$0xff] %vm1893, %v1817
    %1915 = vst.msk [vmem:[#allocation7 + $0xa8] sm:$0xff] %vm1893, %v1818
    %1916 = vst.msk [vmem:[#allocation7 + $0xb0] sm:$0xff] %vm1893, %v1819
    %1917 = vst.msk [vmem:[#allocation7 + $0xb8] sm:$0xff] %vm1893, %v1820
    %1918 = vst.msk [vmem:[#allocation7 + $0xc0] sm:$0xff] %vm1893, %v1821
    %1919 = vst.msk [vmem:[#allocation7 + $0xc8] sm:$0xff] %vm1893, %v1822
    %1920 = vst.msk [vmem:[#allocation7 + $0xd0] sm:$0xff] %vm1893, %v1823
    %1921 = vst.msk [vmem:[#allocation7 + $0xd8] sm:$0xff] %vm1893, %v1824
    %1922 = vst.msk [vmem:[#allocation7 + $0xe0] sm:$0xff] %vm1893, %v1825
    %1923 = vst.msk [vmem:[#allocation7 + $0xe8] sm:$0xff] %vm1893, %v1826
    %1924 = vst.msk [vmem:[#allocation7 + $0xf0] sm:$0xff] %vm1893, %v1827
    %1925 = vst.msk [vmem:[#allocation7 + $0xf8] sm:$0xff] %vm1893, %v1828
    %1926 = vst.msk [vmem:[#allocation7 + $0x100] sm:$0xff] %vm1893, %v1845
    %1927 = vst.msk [vmem:[#allocation7 + $0x108] sm:$0xff] %vm1893, %v1846
    %1928 = vst.msk [vmem:[#allocation7 + $0x110] sm:$0xff] %vm1893, %v1847
    %1929 = vst.msk [vmem:[#allocation7 + $0x118] sm:$0xff] %vm1893, %v1848
    %1930 = vst.msk [vmem:[#allocation7 + $0x120] sm:$0xff] %vm1893, %v1849
    %1931 = vst.msk [vmem:[#allocation7 + $0x128] sm:$0xff] %vm1893, %v1850
    %1932 = vst.msk [vmem:[#allocation7 + $0x130] sm:$0xff] %vm1893, %v1851
    %1933 = vst.msk [vmem:[#allocation7 + $0x138] sm:$0xff] %vm1893, %v1852
    %1934 = vst.msk [vmem:[#allocation7 + $0x140] sm:$0xff] %vm1893, %v1853
    %1935 = vst.msk [vmem:[#allocation7 + $0x148] sm:$0xff] %vm1893, %v1854
    %1936 = vst.msk [vmem:[#allocation7 + $0x150] sm:$0xff] %vm1893, %v1855
    %1937 = vst.msk [vmem:[#allocation7 + $0x158] sm:$0xff] %vm1893, %v1856
    %1938 = vst.msk [vmem:[#allocation7 + $0x160] sm:$0xff] %vm1893, %v1857
    %1939 = vst.msk [vmem:[#allocation7 + $0x168] sm:$0xff] %vm1893, %v1858
    %1940 = vst.msk [vmem:[#allocation7 + $0x170] sm:$0xff] %vm1893, %v1859
    %1941 = vst.msk [vmem:[#allocation7 + $0x178] sm:$0xff] %vm1893, %v1860
    %1942 = vst.msk [vmem:[#allocation7 + $0x180] sm:$0xff] %vm1893, %v1877
    %1943 = vst.msk [vmem:[#allocation7 + $0x188] sm:$0xff] %vm1893, %v1878
    %1944 = vst.msk [vmem:[#allocation7 + $0x190] sm:$0xff] %vm1893, %v1879
    %1945 = vst.msk [vmem:[#allocation7 + $0x198] sm:$0xff] %vm1893, %v1880
    %1946 = vst.msk [vmem:[#allocation7 + $0x1a0] sm:$0xff] %vm1893, %v1881
    %1947 = vst.msk [vmem:[#allocation7 + $0x1a8] sm:$0xff] %vm1893, %v1882
    %1948 = vst.msk [vmem:[#allocation7 + $0x1b0] sm:$0xff] %vm1893, %v1883
    %1949 = vst.msk [vmem:[#allocation7 + $0x1b8] sm:$0xff] %vm1893, %v1884
    %1950 = vst.msk [vmem:[#allocation7 + $0x1c0] sm:$0xff] %vm1893, %v1885
    %1951 = vst.msk [vmem:[#allocation7 + $0x1c8] sm:$0xff] %vm1893, %v1886
    %1952 = vst.msk [vmem:[#allocation7 + $0x1d0] sm:$0xff] %vm1893, %v1887
    %1953 = vst.msk [vmem:[#allocation7 + $0x1d8] sm:$0xff] %vm1893, %v1888
    %1954 = vst.msk [vmem:[#allocation7 + $0x1e0] sm:$0xff] %vm1893, %v1889
    %1955 = vst.msk [vmem:[#allocation7 + $0x1e8] sm:$0xff] %vm1893, %v1890
    %1956 = vst.msk [vmem:[#allocation7 + $0x1f0] sm:$0xff] %vm1893, %v1891
    %1957 = vst.msk [vmem:[#allocation7 + $0x1f8] sm:$0xff] %vm1893, %v1892
    // Predicated region
    $region18: #{tpu_custom_call.1} parent=1 // pred_check
      _
    $region19: #{tpu_custom_call.1} parent=1 // pred_check_branch
      %1959 = sbr.rel (0) target = $region21
    $region20: #{tpu_custom_call.1} parent=1 // pred_region
      %s1961 = ssub.s32 8192, 384
      %1962 = vsyncadd [#allocation4], %s1961
      %s1963 = sshll.u32 [#allocation7], 4
      %s1964 = int_to_ptr.vmem [resolvable:$true] %s1963
      %1969 = dma.vmem_to_hbm [thread:$0]  %s1964, 384, %s2, [#allocation4], 128, 128, 8
    $region21: #{tpu_custom_call.1} parent=1 // pred_fallthru
      _
    // Predicated region
    $region22: #{tpu_custom_call.1} parent=1 // pred_check
      _
    $region23: #{tpu_custom_call.1} parent=1 // pred_check_branch
      %1971 = sbr.rel (0) target = $region25
    $region24: #{tpu_custom_call.1} parent=1 // pred_region
      %1972 = dma.done [#allocation4], 8192
    $region25: #{tpu_custom_call.1} parent=1 // pred_fallthru
      _
    %1973 = vsyncpa [#allocation3], 1
    %1974 = vsyncpa [#allocation6], 1
    %1975 = vsyncpa [#allocation4], 1

</llo_original>
